<compile_context>
chip_gen: v6e
topology: v6e:2x2x1
jax: 0.10.0
libtpu: 0.0.40
codegen_flags: <defaults>
</compile_context>

<pallas_src>
import functools

import jax
import jax.numpy as jnp
from jax.experimental import pallas as pl
from jax.experimental.pallas import tpu as pltpu


# ------------------------------- fused kernel ------------------------------- #

def mha_kernel(x_ref, wq_ref, wk_ref, wv_ref, bq_ref, bk_ref, bv_ref,
               wp_ref, bp_ref, o_ref, *, num_heads, scale):
    """One batch element: qkv projection -> per-head attention -> output projection.

    x_ref  : (1, S, E)      activations for this batch element
    wq/wk/wv_ref : (H, E, D) per-head projection weights (bf16-cast at use)
    bq/bk/bv_ref : (H, 1, D) per-head projection biases (f32)
    wp_ref : (H, D, E)      per-head rows of the output projection
    bp_ref : (1, E)         output projection bias
    o_ref  : (1, S, E)      output, written lane-dense in final (B, S, E) layout
    """
    x = x_ref[0].astype(jnp.bfloat16)                                   # (S, E)

    acc = None
    for h in range(num_heads):                                          # static unroll
        wq = wq_ref[h].astype(jnp.bfloat16)                             # (E, D)
        wk = wk_ref[h].astype(jnp.bfloat16)
        wv = wv_ref[h].astype(jnp.bfloat16)

        # per-head q, k, v projections (bf16 MXU inputs, f32 accumulation + bias)
        q = jnp.dot(x, wq, preferred_element_type=jnp.float32) + bq_ref[h]   # (S, D)
        k = jnp.dot(x, wk, preferred_element_type=jnp.float32) + bk_ref[h]   # (S, D)
        v = jnp.dot(x, wv, preferred_element_type=jnp.float32) + bv_ref[h]   # (S, D)

        # scores: contract last dims of q and k (no explicit transpose of K)
        s = jax.lax.dot_general(
            q.astype(jnp.bfloat16), k.astype(jnp.bfloat16),
            (((1,), (1,)), ((), ())),
            preferred_element_type=jnp.float32) * scale                      # (S, S) f32

        # numerically stable softmax, elementwise math kept in f32
        m = jnp.max(s, axis=-1, keepdims=True)
        p = jnp.exp(s - m)
        l = jnp.sum(p, axis=-1, keepdims=True)
        # TODO(synk): nn.Dropout on attention weights is identity in eval mode; the
        # training-mode RNG dropout is intentionally not implemented here.

        pv = jnp.dot(p.astype(jnp.bfloat16), v.astype(jnp.bfloat16),
                     preferred_element_type=jnp.float32)                     # (S, D)
        # normalize with an (S, D) multiply instead of an (S, S) divide; the
        # reciprocal runs on the EUP slot (effectively free)
        o_h = (pv * pl.reciprocal(l, approx=True)).astype(jnp.bfloat16)      # (S, D)

        # fold the output projection per head:
        #   concat_h(o_h) @ Wp == sum_h o_h @ Wp[h*D:(h+1)*D, :]
        contrib = jnp.dot(o_h, wp_ref[h].astype(jnp.bfloat16),
                          preferred_element_type=jnp.float32)                # (S, E)
        acc = contrib if acc is None else acc + contrib

    o_ref[0] = (acc + bp_ref[...]).astype(o_ref.dtype)


# --------------------------------- wrapper ---------------------------------- #

def multi_head_attention(x, packed_params, num_heads):
    """Fused forward pass matching the PyTorch MultiHeadAttention module (eval mode)."""
    wq, wk, wv, bq, bk, bv, wp, bp = packed_params
    B, S, E = x.shape
    D = E // num_heads
    assert D * num_heads == E, "embed_dim must be divisible by num_heads"

    kernel = functools.partial(mha_kernel, num_heads=num_heads, scale=float(D) ** -0.5)
    zero3 = lambda b: (0, 0, 0)

    return pl.pallas_call(
        kernel,
        out_shape=jax.ShapeDtypeStruct((B, S, E), x.dtype),
        grid=(B,),
        in_specs=[
            pl.BlockSpec((1, S, E), lambda b: (b, 0, 0)),         # x (per-batch block)
            pl.BlockSpec((num_heads, E, D), zero3),               # wq (VMEM-resident)
            pl.BlockSpec((num_heads, E, D), zero3),               # wk
            pl.BlockSpec((num_heads, E, D), zero3),               # wv
            pl.BlockSpec((num_heads, 1, D), zero3),               # bq
            pl.BlockSpec((num_heads, 1, D), zero3),               # bk
            pl.BlockSpec((num_heads, 1, D), zero3),               # bv
            pl.BlockSpec((num_heads, D, E), zero3),               # wproj (per-head rows)
            pl.BlockSpec((1, E), lambda b: (0, 0)),               # bproj
        ],
        out_specs=pl.BlockSpec((1, S, E), lambda b: (b, 0, 0)),   # lane-dense (S, E) block
        compiler_params=pltpu.CompilerParams(
            dimension_semantics=("parallel",),                    # B steps -> both v7x TCs
        ),
    )(x, wq, wk, wv, bq, bk, bv, wp, bp)


# --------------------------- parameters & packing ---------------------------- #

def init_params(key, embed_dim):
    """PyTorch-layout parameters, stored (in, out) so GEMMs are x @ w + b."""
    k1, k2, k3, k4 = jax.random.split(key, 4)
    wqkv = jax.random.normal(k1, (embed_dim, 3 * embed_dim), jnp.float32) * 0.02
    bqkv = jax.random.normal(k2, (3 * embed_dim,), jnp.float32) * 0.01
    wproj = jax.random.normal(k3, (embed_dim, embed_dim), jnp.float32) * 0.02
    bproj = jax.random.normal(k4, (embed_dim,), jnp.float32) * 0.01
    return wqkv, bqkv, wproj, bproj


def pack_params(params, num_heads):
    """One-time re-layout of the Linear params into per-head slabs so the kernel
    selects heads by leading-axis ref indexing (no in-kernel lane slicing and no
    per-step activation transposes in HBM)."""
    wqkv, bqkv, wproj, bproj = params
    E = wproj.shape[0]
    D = E // num_heads
    # qkv columns are ordered (3, H, D)  ->  (3, H, E, D)
    w3 = wqkv.reshape(E, 3, num_heads, D).transpose(1, 2, 0, 3)
    b3 = bqkv.reshape(3, num_heads, 1, D)
    # proj rows (input features) are ordered (H, D)  ->  (H, D, E)
    wp = wproj.reshape(num_heads, D, E)
    bp = bproj.reshape(1, E)
    return w3[0], w3[1], w3[2], b3[0], b3[1], b3[2], wp, bp


# ----------------------------- pure-JAX reference ---------------------------- #

def reference_forward(x, params, num_heads):
    wqkv, bqkv, wproj, bproj = params
    B, S, E = x.shape
    D = E // num_heads
    qkv = x @ wqkv + bqkv
    qkv = qkv.reshape(B, S, 3, num_heads, D).transpose(2, 0, 3, 1, 4)
    q, k, v = qkv[0], qkv[1], qkv[2]
    attn = jax.nn.softmax((q @ jnp.swapaxes(k, -2, -1)) * D ** -0.5, axis=-1)
    o = (attn @ v).transpose(0, 2, 1, 3).reshape(B, S, E)
    return o @ wproj + bproj


if __name__ == "__main__":
    key = jax.random.PRNGKey(0)
    key, kx = jax.random.split(key)
    B, S, E, H = 2, 16, 64, 4            # batch=2, seq=16, embed_dim=64, heads=4 (head_dim=16)
    x = jax.random.normal(kx, (B, S, E), jnp.float32)
    params = init_params(key, E)
    packed = pack_params(params, H)

    out = jax.block_until_ready(multi_head_attention(x, packed, num_heads=H))

    assert out.shape == (B, S, E), out.shape
    assert bool(jnp.all(jnp.isfinite(out)))

    ref = reference_forward(x, params, H)
    # bf16 MXU inputs + approx reciprocal (per perf review) -> looser tolerance vs f32 ref.
    max_err = float(jnp.max(jnp.abs(out - ref)))
    assert bool(jnp.allclose(out, ref, atol=2e-2, rtol=2e-2)), f"mismatch vs reference: {max_err}"

    print("KERNEL_OK")
</pallas_src>

<mosaic_0001>
module attributes {stable_mosaic.version = 11 : i64} {
  func.func @mha_kernel(%arg0: i32, %arg1: memref<1x16x64xf32, #tpu.memory_space<vmem>>, %arg2: memref<4x64x16xf32, #tpu.memory_space<vmem>>, %arg3: memref<4x64x16xf32, #tpu.memory_space<vmem>>, %arg4: memref<4x64x16xf32, #tpu.memory_space<vmem>>, %arg5: memref<4x1x16xf32, #tpu.memory_space<vmem>>, %arg6: memref<4x1x16xf32, #tpu.memory_space<vmem>>, %arg7: memref<4x1x16xf32, #tpu.memory_space<vmem>>, %arg8: memref<4x16x64xf32, #tpu.memory_space<vmem>>, %arg9: memref<1x64xf32, #tpu.memory_space<vmem>>, %arg10: memref<1x16x64xf32, #tpu.memory_space<vmem>>) attributes {dimension_semantics = [#tpu.dimension_semantics<parallel>], iteration_bounds = array<i64: 2>, scalar_prefetch = 0 : i64, scratch_operands = 0 : i64, tpu.core_type = #tpu.core_type<tc>, window_params = [{transform_indices = @transform_0, window_bounds = array<i64: 1, 16, 64>}, {pipeline_mode = #tpu.pipeline_mode<synchronous>, transform_indices = @transform_1, window_bounds = array<i64: 4, 64, 16>}, {pipeline_mode = #tpu.pipeline_mode<synchronous>, transform_indices = @transform_2, window_bounds = array<i64: 4, 64, 16>}, {pipeline_mode = #tpu.pipeline_mode<synchronous>, transform_indices = @transform_3, window_bounds = array<i64: 4, 64, 16>}, {pipeline_mode = #tpu.pipeline_mode<synchronous>, transform_indices = @transform_4, window_bounds = array<i64: 4, 1, 16>}, {pipeline_mode = #tpu.pipeline_mode<synchronous>, transform_indices = @transform_5, window_bounds = array<i64: 4, 1, 16>}, {pipeline_mode = #tpu.pipeline_mode<synchronous>, transform_indices = @transform_6, window_bounds = array<i64: 4, 1, 16>}, {pipeline_mode = #tpu.pipeline_mode<synchronous>, transform_indices = @transform_7, window_bounds = array<i64: 4, 16, 64>}, {pipeline_mode = #tpu.pipeline_mode<synchronous>, transform_indices = @transform_8, window_bounds = array<i64: 1, 64>}, {transform_indices = @transform_9, window_bounds = array<i64: 1, 16, 64>}]} {
    %c0 = arith.constant 0 : index
    %c0_0 = arith.constant 0 : index
    %c0_1 = arith.constant 0 : index
    %0 = vector.load %arg1[%c0, %c0_0, %c0_1] : memref<1x16x64xf32, #tpu.memory_space<vmem>>, vector<1x16x64xf32>
    %1 = vector.shape_cast %0 : vector<1x16x64xf32> to vector<16x64xf32>
    %2 = arith.truncf %1 : vector<16x64xf32> to vector<16x64xbf16>
    %c0_2 = arith.constant 0 : index
    %c0_3 = arith.constant 0 : index
    %c0_4 = arith.constant 0 : index
    %3 = vector.load %arg2[%c0_2, %c0_3, %c0_4] : memref<4x64x16xf32, #tpu.memory_space<vmem>>, vector<1x64x16xf32>
    %4 = vector.shape_cast %3 : vector<1x64x16xf32> to vector<64x16xf32>
    %5 = arith.truncf %4 : vector<64x16xf32> to vector<64x16xbf16>
    %c0_5 = arith.constant 0 : index
    %c0_6 = arith.constant 0 : index
    %c0_7 = arith.constant 0 : index
    %6 = vector.load %arg3[%c0_5, %c0_6, %c0_7] : memref<4x64x16xf32, #tpu.memory_space<vmem>>, vector<1x64x16xf32>
    %7 = vector.shape_cast %6 : vector<1x64x16xf32> to vector<64x16xf32>
    %8 = arith.truncf %7 : vector<64x16xf32> to vector<64x16xbf16>
    %c0_8 = arith.constant 0 : index
    %c0_9 = arith.constant 0 : index
    %c0_10 = arith.constant 0 : index
    %9 = vector.load %arg4[%c0_8, %c0_9, %c0_10] : memref<4x64x16xf32, #tpu.memory_space<vmem>>, vector<1x64x16xf32>
    %10 = vector.shape_cast %9 : vector<1x64x16xf32> to vector<64x16xf32>
    %11 = arith.truncf %10 : vector<64x16xf32> to vector<64x16xbf16>
    %cst = arith.constant dense<0.000000e+00> : vector<16x16xf32>
    %12 = tpu.matmul %2, %5, %cst {dimension_numbers = #tpu.dot_dimension_numbers<[1], [0], [0], [1], [0, 0, 1, 1], [], []>} : vector<16x64xbf16>, vector<64x16xbf16>, vector<16x16xf32> -> vector<16x16xf32>
    %c0_11 = arith.constant 0 : index
    %c0_12 = arith.constant 0 : index
    %c0_13 = arith.constant 0 : index
    %13 = vector.load %arg5[%c0_11, %c0_12, %c0_13] : memref<4x1x16xf32, #tpu.memory_space<vmem>>, vector<1x1x16xf32>
    %14 = vector.shape_cast %13 : vector<1x1x16xf32> to vector<1x16xf32>
    %15 = vector.broadcast %14 : vector<1x16xf32> to vector<16x16xf32>
    %16 = arith.addf %12, %15 : vector<16x16xf32>
    %cst_14 = arith.constant dense<0.000000e+00> : vector<16x16xf32>
    %17 = tpu.matmul %2, %8, %cst_14 {dimension_numbers = #tpu.dot_dimension_numbers<[1], [0], [0], [1], [0, 0, 1, 1], [], []>} : vector<16x64xbf16>, vector<64x16xbf16>, vector<16x16xf32> -> vector<16x16xf32>
    %c0_15 = arith.constant 0 : index
    %c0_16 = arith.constant 0 : index
    %c0_17 = arith.constant 0 : index
    %18 = vector.load %arg6[%c0_15, %c0_16, %c0_17] : memref<4x1x16xf32, #tpu.memory_space<vmem>>, vector<1x1x16xf32>
    %19 = vector.shape_cast %18 : vector<1x1x16xf32> to vector<1x16xf32>
    %20 = vector.broadcast %19 : vector<1x16xf32> to vector<16x16xf32>
    %21 = arith.addf %17, %20 : vector<16x16xf32>
    %cst_18 = arith.constant dense<0.000000e+00> : vector<16x16xf32>
    %22 = tpu.matmul %2, %11, %cst_18 {dimension_numbers = #tpu.dot_dimension_numbers<[1], [0], [0], [1], [0, 0, 1, 1], [], []>} : vector<16x64xbf16>, vector<64x16xbf16>, vector<16x16xf32> -> vector<16x16xf32>
    %c0_19 = arith.constant 0 : index
    %c0_20 = arith.constant 0 : index
    %c0_21 = arith.constant 0 : index
    %23 = vector.load %arg7[%c0_19, %c0_20, %c0_21] : memref<4x1x16xf32, #tpu.memory_space<vmem>>, vector<1x1x16xf32>
    %24 = vector.shape_cast %23 : vector<1x1x16xf32> to vector<1x16xf32>
    %25 = vector.broadcast %24 : vector<1x16xf32> to vector<16x16xf32>
    %26 = arith.addf %22, %25 : vector<16x16xf32>
    %27 = arith.truncf %16 : vector<16x16xf32> to vector<16x16xbf16>
    %28 = arith.truncf %21 : vector<16x16xf32> to vector<16x16xbf16>
    %cst_22 = arith.constant dense<0.000000e+00> : vector<16x16xf32>
    %29 = tpu.matmul %27, %28, %cst_22 {dimension_numbers = #tpu.dot_dimension_numbers<[1], [1], [0], [0], [0, 0, 1, 0], [], []>} : vector<16x16xbf16>, vector<16x16xbf16>, vector<16x16xf32> -> vector<16x16xf32>
    %cst_23 = arith.constant 2.500000e-01 : f32
    %30 = vector.broadcast %cst_23 : f32 to vector<16x16xf32>
    %31 = arith.mulf %29, %30 : vector<16x16xf32>
    %cst_24 = arith.constant dense<0xFF800000> : vector<16xf32>
    %32 = vector.multi_reduction <maximumf>, %31, %cst_24 [1] : vector<16x16xf32> to vector<16xf32>
    %33 = vector.shape_cast %32 : vector<16xf32> to vector<16x1xf32>
    %34 = vector.broadcast %33 : vector<16x1xf32> to vector<16x16xf32>
    %35 = arith.subf %31, %34 : vector<16x16xf32>
    %36 = math.exp %35 : vector<16x16xf32>
    %cst_25 = arith.constant dense<0.000000e+00> : vector<16xf32>
    %37 = vector.multi_reduction <add>, %36, %cst_25 [1] : vector<16x16xf32> to vector<16xf32>
    %38 = vector.shape_cast %37 : vector<16xf32> to vector<16x1xf32>
    %39 = arith.truncf %36 : vector<16x16xf32> to vector<16x16xbf16>
    %40 = arith.truncf %26 : vector<16x16xf32> to vector<16x16xbf16>
    %cst_26 = arith.constant dense<0.000000e+00> : vector<16x16xf32>
    %41 = tpu.matmul %39, %40, %cst_26 {dimension_numbers = #tpu.dot_dimension_numbers<[1], [0], [0], [1], [0, 0, 1, 1], [], []>} : vector<16x16xbf16>, vector<16x16xbf16>, vector<16x16xf32> -> vector<16x16xf32>
    %42 = tpu.reciprocal %38 {approx = true} : vector<16x1xf32> -> vector<16x1xf32>
    %43 = vector.broadcast %42 : vector<16x1xf32> to vector<16x16xf32>
    %44 = arith.mulf %41, %43 : vector<16x16xf32>
    %45 = arith.truncf %44 : vector<16x16xf32> to vector<16x16xbf16>
    %c0_27 = arith.constant 0 : index
    %c0_28 = arith.constant 0 : index
    %c0_29 = arith.constant 0 : index
    %46 = vector.load %arg8[%c0_27, %c0_28, %c0_29] : memref<4x16x64xf32, #tpu.memory_space<vmem>>, vector<1x16x64xf32>
    %47 = vector.shape_cast %46 : vector<1x16x64xf32> to vector<16x64xf32>
    %48 = arith.truncf %47 : vector<16x64xf32> to vector<16x64xbf16>
    %cst_30 = arith.constant dense<0.000000e+00> : vector<16x64xf32>
    %49 = tpu.matmul %45, %48, %cst_30 {dimension_numbers = #tpu.dot_dimension_numbers<[1], [0], [0], [1], [0, 0, 1, 1], [], []>} : vector<16x16xbf16>, vector<16x64xbf16>, vector<16x64xf32> -> vector<16x64xf32>
    %c1 = arith.constant 1 : index
    %c0_31 = arith.constant 0 : index
    %c0_32 = arith.constant 0 : index
    %50 = vector.load %arg2[%c1, %c0_31, %c0_32] : memref<4x64x16xf32, #tpu.memory_space<vmem>>, vector<1x64x16xf32>
    %51 = vector.shape_cast %50 : vector<1x64x16xf32> to vector<64x16xf32>
    %52 = arith.truncf %51 : vector<64x16xf32> to vector<64x16xbf16>
    %c1_33 = arith.constant 1 : index
    %c0_34 = arith.constant 0 : index
    %c0_35 = arith.constant 0 : index
    %53 = vector.load %arg3[%c1_33, %c0_34, %c0_35] : memref<4x64x16xf32, #tpu.memory_space<vmem>>, vector<1x64x16xf32>
    %54 = vector.shape_cast %53 : vector<1x64x16xf32> to vector<64x16xf32>
    %55 = arith.truncf %54 : vector<64x16xf32> to vector<64x16xbf16>
    %c1_36 = arith.constant 1 : index
    %c0_37 = arith.constant 0 : index
    %c0_38 = arith.constant 0 : index
    %56 = vector.load %arg4[%c1_36, %c0_37, %c0_38] : memref<4x64x16xf32, #tpu.memory_space<vmem>>, vector<1x64x16xf32>
    %57 = vector.shape_cast %56 : vector<1x64x16xf32> to vector<64x16xf32>
    %58 = arith.truncf %57 : vector<64x16xf32> to vector<64x16xbf16>
    %cst_39 = arith.constant dense<0.000000e+00> : vector<16x16xf32>
    %59 = tpu.matmul %2, %52, %cst_39 {dimension_numbers = #tpu.dot_dimension_numbers<[1], [0], [0], [1], [0, 0, 1, 1], [], []>} : vector<16x64xbf16>, vector<64x16xbf16>, vector<16x16xf32> -> vector<16x16xf32>
    %c1_40 = arith.constant 1 : index
    %c0_41 = arith.constant 0 : index
    %c0_42 = arith.constant 0 : index
    %60 = vector.load %arg5[%c1_40, %c0_41, %c0_42] : memref<4x1x16xf32, #tpu.memory_space<vmem>>, vector<1x1x16xf32>
    %61 = vector.shape_cast %60 : vector<1x1x16xf32> to vector<1x16xf32>
    %62 = vector.broadcast %61 : vector<1x16xf32> to vector<16x16xf32>
    %63 = arith.addf %59, %62 : vector<16x16xf32>
    %cst_43 = arith.constant dense<0.000000e+00> : vector<16x16xf32>
    %64 = tpu.matmul %2, %55, %cst_43 {dimension_numbers = #tpu.dot_dimension_numbers<[1], [0], [0], [1], [0, 0, 1, 1], [], []>} : vector<16x64xbf16>, vector<64x16xbf16>, vector<16x16xf32> -> vector<16x16xf32>
    %c1_44 = arith.constant 1 : index
    %c0_45 = arith.constant 0 : index
    %c0_46 = arith.constant 0 : index
    %65 = vector.load %arg6[%c1_44, %c0_45, %c0_46] : memref<4x1x16xf32, #tpu.memory_space<vmem>>, vector<1x1x16xf32>
    %66 = vector.shape_cast %65 : vector<1x1x16xf32> to vector<1x16xf32>
    %67 = vector.broadcast %66 : vector<1x16xf32> to vector<16x16xf32>
    %68 = arith.addf %64, %67 : vector<16x16xf32>
    %cst_47 = arith.constant dense<0.000000e+00> : vector<16x16xf32>
    %69 = tpu.matmul %2, %58, %cst_47 {dimension_numbers = #tpu.dot_dimension_numbers<[1], [0], [0], [1], [0, 0, 1, 1], [], []>} : vector<16x64xbf16>, vector<64x16xbf16>, vector<16x16xf32> -> vector<16x16xf32>
    %c1_48 = arith.constant 1 : index
    %c0_49 = arith.constant 0 : index
    %c0_50 = arith.constant 0 : index
    %70 = vector.load %arg7[%c1_48, %c0_49, %c0_50] : memref<4x1x16xf32, #tpu.memory_space<vmem>>, vector<1x1x16xf32>
    %71 = vector.shape_cast %70 : vector<1x1x16xf32> to vector<1x16xf32>
    %72 = vector.broadcast %71 : vector<1x16xf32> to vector<16x16xf32>
    %73 = arith.addf %69, %72 : vector<16x16xf32>
    %74 = arith.truncf %63 : vector<16x16xf32> to vector<16x16xbf16>
    %75 = arith.truncf %68 : vector<16x16xf32> to vector<16x16xbf16>
    %cst_51 = arith.constant dense<0.000000e+00> : vector<16x16xf32>
    %76 = tpu.matmul %74, %75, %cst_51 {dimension_numbers = #tpu.dot_dimension_numbers<[1], [1], [0], [0], [0, 0, 1, 0], [], []>} : vector<16x16xbf16>, vector<16x16xbf16>, vector<16x16xf32> -> vector<16x16xf32>
    %cst_52 = arith.constant 2.500000e-01 : f32
    %77 = vector.broadcast %cst_52 : f32 to vector<16x16xf32>
    %78 = arith.mulf %76, %77 : vector<16x16xf32>
    %cst_53 = arith.constant dense<0xFF800000> : vector<16xf32>
    %79 = vector.multi_reduction <maximumf>, %78, %cst_53 [1] : vector<16x16xf32> to vector<16xf32>
    %80 = vector.shape_cast %79 : vector<16xf32> to vector<16x1xf32>
    %81 = vector.broadcast %80 : vector<16x1xf32> to vector<16x16xf32>
    %82 = arith.subf %78, %81 : vector<16x16xf32>
    %83 = math.exp %82 : vector<16x16xf32>
    %cst_54 = arith.constant dense<0.000000e+00> : vector<16xf32>
    %84 = vector.multi_reduction <add>, %83, %cst_54 [1] : vector<16x16xf32> to vector<16xf32>
    %85 = vector.shape_cast %84 : vector<16xf32> to vector<16x1xf32>
    %86 = arith.truncf %83 : vector<16x16xf32> to vector<16x16xbf16>
    %87 = arith.truncf %73 : vector<16x16xf32> to vector<16x16xbf16>
    %cst_55 = arith.constant dense<0.000000e+00> : vector<16x16xf32>
    %88 = tpu.matmul %86, %87, %cst_55 {dimension_numbers = #tpu.dot_dimension_numbers<[1], [0], [0], [1], [0, 0, 1, 1], [], []>} : vector<16x16xbf16>, vector<16x16xbf16>, vector<16x16xf32> -> vector<16x16xf32>
    %89 = tpu.reciprocal %85 {approx = true} : vector<16x1xf32> -> vector<16x1xf32>
    %90 = vector.broadcast %89 : vector<16x1xf32> to vector<16x16xf32>
    %91 = arith.mulf %88, %90 : vector<16x16xf32>
    %92 = arith.truncf %91 : vector<16x16xf32> to vector<16x16xbf16>
    %c1_56 = arith.constant 1 : index
    %c0_57 = arith.constant 0 : index
    %c0_58 = arith.constant 0 : index
    %93 = vector.load %arg8[%c1_56, %c0_57, %c0_58] : memref<4x16x64xf32, #tpu.memory_space<vmem>>, vector<1x16x64xf32>
    %94 = vector.shape_cast %93 : vector<1x16x64xf32> to vector<16x64xf32>
    %95 = arith.truncf %94 : vector<16x64xf32> to vector<16x64xbf16>
    %cst_59 = arith.constant dense<0.000000e+00> : vector<16x64xf32>
    %96 = tpu.matmul %92, %95, %cst_59 {dimension_numbers = #tpu.dot_dimension_numbers<[1], [0], [0], [1], [0, 0, 1, 1], [], []>} : vector<16x16xbf16>, vector<16x64xbf16>, vector<16x64xf32> -> vector<16x64xf32>
    %97 = arith.addf %49, %96 : vector<16x64xf32>
    %c2 = arith.constant 2 : index
    %c0_60 = arith.constant 0 : index
    %c0_61 = arith.constant 0 : index
    %98 = vector.load %arg2[%c2, %c0_60, %c0_61] : memref<4x64x16xf32, #tpu.memory_space<vmem>>, vector<1x64x16xf32>
    %99 = vector.shape_cast %98 : vector<1x64x16xf32> to vector<64x16xf32>
    %100 = arith.truncf %99 : vector<64x16xf32> to vector<64x16xbf16>
    %c2_62 = arith.constant 2 : index
    %c0_63 = arith.constant 0 : index
    %c0_64 = arith.constant 0 : index
    %101 = vector.load %arg3[%c2_62, %c0_63, %c0_64] : memref<4x64x16xf32, #tpu.memory_space<vmem>>, vector<1x64x16xf32>
    %102 = vector.shape_cast %101 : vector<1x64x16xf32> to vector<64x16xf32>
    %103 = arith.truncf %102 : vector<64x16xf32> to vector<64x16xbf16>
    %c2_65 = arith.constant 2 : index
    %c0_66 = arith.constant 0 : index
    %c0_67 = arith.constant 0 : index
    %104 = vector.load %arg4[%c2_65, %c0_66, %c0_67] : memref<4x64x16xf32, #tpu.memory_space<vmem>>, vector<1x64x16xf32>
    %105 = vector.shape_cast %104 : vector<1x64x16xf32> to vector<64x16xf32>
    %106 = arith.truncf %105 : vector<64x16xf32> to vector<64x16xbf16>
    %cst_68 = arith.constant dense<0.000000e+00> : vector<16x16xf32>
    %107 = tpu.matmul %2, %100, %cst_68 {dimension_numbers = #tpu.dot_dimension_numbers<[1], [0], [0], [1], [0, 0, 1, 1], [], []>} : vector<16x64xbf16>, vector<64x16xbf16>, vector<16x16xf32> -> vector<16x16xf32>
    %c2_69 = arith.constant 2 : index
    %c0_70 = arith.constant 0 : index
    %c0_71 = arith.constant 0 : index
    %108 = vector.load %arg5[%c2_69, %c0_70, %c0_71] : memref<4x1x16xf32, #tpu.memory_space<vmem>>, vector<1x1x16xf32>
    %109 = vector.shape_cast %108 : vector<1x1x16xf32> to vector<1x16xf32>
    %110 = vector.broadcast %109 : vector<1x16xf32> to vector<16x16xf32>
    %111 = arith.addf %107, %110 : vector<16x16xf32>
    %cst_72 = arith.constant dense<0.000000e+00> : vector<16x16xf32>
    %112 = tpu.matmul %2, %103, %cst_72 {dimension_numbers = #tpu.dot_dimension_numbers<[1], [0], [0], [1], [0, 0, 1, 1], [], []>} : vector<16x64xbf16>, vector<64x16xbf16>, vector<16x16xf32> -> vector<16x16xf32>
    %c2_73 = arith.constant 2 : index
    %c0_74 = arith.constant 0 : index
    %c0_75 = arith.constant 0 : index
    %113 = vector.load %arg6[%c2_73, %c0_74, %c0_75] : memref<4x1x16xf32, #tpu.memory_space<vmem>>, vector<1x1x16xf32>
    %114 = vector.shape_cast %113 : vector<1x1x16xf32> to vector<1x16xf32>
    %115 = vector.broadcast %114 : vector<1x16xf32> to vector<16x16xf32>
    %116 = arith.addf %112, %115 : vector<16x16xf32>
    %cst_76 = arith.constant dense<0.000000e+00> : vector<16x16xf32>
    %117 = tpu.matmul %2, %106, %cst_76 {dimension_numbers = #tpu.dot_dimension_numbers<[1], [0], [0], [1], [0, 0, 1, 1], [], []>} : vector<16x64xbf16>, vector<64x16xbf16>, vector<16x16xf32> -> vector<16x16xf32>
    %c2_77 = arith.constant 2 : index
    %c0_78 = arith.constant 0 : index
    %c0_79 = arith.constant 0 : index
    %118 = vector.load %arg7[%c2_77, %c0_78, %c0_79] : memref<4x1x16xf32, #tpu.memory_space<vmem>>, vector<1x1x16xf32>
    %119 = vector.shape_cast %118 : vector<1x1x16xf32> to vector<1x16xf32>
    %120 = vector.broadcast %119 : vector<1x16xf32> to vector<16x16xf32>
    %121 = arith.addf %117, %120 : vector<16x16xf32>
    %122 = arith.truncf %111 : vector<16x16xf32> to vector<16x16xbf16>
    %123 = arith.truncf %116 : vector<16x16xf32> to vector<16x16xbf16>
    %cst_80 = arith.constant dense<0.000000e+00> : vector<16x16xf32>
    %124 = tpu.matmul %122, %123, %cst_80 {dimension_numbers = #tpu.dot_dimension_numbers<[1], [1], [0], [0], [0, 0, 1, 0], [], []>} : vector<16x16xbf16>, vector<16x16xbf16>, vector<16x16xf32> -> vector<16x16xf32>
    %cst_81 = arith.constant 2.500000e-01 : f32
    %125 = vector.broadcast %cst_81 : f32 to vector<16x16xf32>
    %126 = arith.mulf %124, %125 : vector<16x16xf32>
    %cst_82 = arith.constant dense<0xFF800000> : vector<16xf32>
    %127 = vector.multi_reduction <maximumf>, %126, %cst_82 [1] : vector<16x16xf32> to vector<16xf32>
    %128 = vector.shape_cast %127 : vector<16xf32> to vector<16x1xf32>
    %129 = vector.broadcast %128 : vector<16x1xf32> to vector<16x16xf32>
    %130 = arith.subf %126, %129 : vector<16x16xf32>
    %131 = math.exp %130 : vector<16x16xf32>
    %cst_83 = arith.constant dense<0.000000e+00> : vector<16xf32>
    %132 = vector.multi_reduction <add>, %131, %cst_83 [1] : vector<16x16xf32> to vector<16xf32>
    %133 = vector.shape_cast %132 : vector<16xf32> to vector<16x1xf32>
    %134 = arith.truncf %131 : vector<16x16xf32> to vector<16x16xbf16>
    %135 = arith.truncf %121 : vector<16x16xf32> to vector<16x16xbf16>
    %cst_84 = arith.constant dense<0.000000e+00> : vector<16x16xf32>
    %136 = tpu.matmul %134, %135, %cst_84 {dimension_numbers = #tpu.dot_dimension_numbers<[1], [0], [0], [1], [0, 0, 1, 1], [], []>} : vector<16x16xbf16>, vector<16x16xbf16>, vector<16x16xf32> -> vector<16x16xf32>
    %137 = tpu.reciprocal %133 {approx = true} : vector<16x1xf32> -> vector<16x1xf32>
    %138 = vector.broadcast %137 : vector<16x1xf32> to vector<16x16xf32>
    %139 = arith.mulf %136, %138 : vector<16x16xf32>
    %140 = arith.truncf %139 : vector<16x16xf32> to vector<16x16xbf16>
    %c2_85 = arith.constant 2 : index
    %c0_86 = arith.constant 0 : index
    %c0_87 = arith.constant 0 : index
    %141 = vector.load %arg8[%c2_85, %c0_86, %c0_87] : memref<4x16x64xf32, #tpu.memory_space<vmem>>, vector<1x16x64xf32>
    %142 = vector.shape_cast %141 : vector<1x16x64xf32> to vector<16x64xf32>
    %143 = arith.truncf %142 : vector<16x64xf32> to vector<16x64xbf16>
    %cst_88 = arith.constant dense<0.000000e+00> : vector<16x64xf32>
    %144 = tpu.matmul %140, %143, %cst_88 {dimension_numbers = #tpu.dot_dimension_numbers<[1], [0], [0], [1], [0, 0, 1, 1], [], []>} : vector<16x16xbf16>, vector<16x64xbf16>, vector<16x64xf32> -> vector<16x64xf32>
    %145 = arith.addf %97, %144 : vector<16x64xf32>
    %c3 = arith.constant 3 : index
    %c0_89 = arith.constant 0 : index
    %c0_90 = arith.constant 0 : index
    %146 = vector.load %arg2[%c3, %c0_89, %c0_90] : memref<4x64x16xf32, #tpu.memory_space<vmem>>, vector<1x64x16xf32>
    %147 = vector.shape_cast %146 : vector<1x64x16xf32> to vector<64x16xf32>
    %148 = arith.truncf %147 : vector<64x16xf32> to vector<64x16xbf16>
    %c3_91 = arith.constant 3 : index
    %c0_92 = arith.constant 0 : index
    %c0_93 = arith.constant 0 : index
    %149 = vector.load %arg3[%c3_91, %c0_92, %c0_93] : memref<4x64x16xf32, #tpu.memory_space<vmem>>, vector<1x64x16xf32>
    %150 = vector.shape_cast %149 : vector<1x64x16xf32> to vector<64x16xf32>
    %151 = arith.truncf %150 : vector<64x16xf32> to vector<64x16xbf16>
    %c3_94 = arith.constant 3 : index
    %c0_95 = arith.constant 0 : index
    %c0_96 = arith.constant 0 : index
    %152 = vector.load %arg4[%c3_94, %c0_95, %c0_96] : memref<4x64x16xf32, #tpu.memory_space<vmem>>, vector<1x64x16xf32>
    %153 = vector.shape_cast %152 : vector<1x64x16xf32> to vector<64x16xf32>
    %154 = arith.truncf %153 : vector<64x16xf32> to vector<64x16xbf16>
    %cst_97 = arith.constant dense<0.000000e+00> : vector<16x16xf32>
    %155 = tpu.matmul %2, %148, %cst_97 {dimension_numbers = #tpu.dot_dimension_numbers<[1], [0], [0], [1], [0, 0, 1, 1], [], []>} : vector<16x64xbf16>, vector<64x16xbf16>, vector<16x16xf32> -> vector<16x16xf32>
    %c3_98 = arith.constant 3 : index
    %c0_99 = arith.constant 0 : index
    %c0_100 = arith.constant 0 : index
    %156 = vector.load %arg5[%c3_98, %c0_99, %c0_100] : memref<4x1x16xf32, #tpu.memory_space<vmem>>, vector<1x1x16xf32>
    %157 = vector.shape_cast %156 : vector<1x1x16xf32> to vector<1x16xf32>
    %158 = vector.broadcast %157 : vector<1x16xf32> to vector<16x16xf32>
    %159 = arith.addf %155, %158 : vector<16x16xf32>
    %cst_101 = arith.constant dense<0.000000e+00> : vector<16x16xf32>
    %160 = tpu.matmul %2, %151, %cst_101 {dimension_numbers = #tpu.dot_dimension_numbers<[1], [0], [0], [1], [0, 0, 1, 1], [], []>} : vector<16x64xbf16>, vector<64x16xbf16>, vector<16x16xf32> -> vector<16x16xf32>
    %c3_102 = arith.constant 3 : index
    %c0_103 = arith.constant 0 : index
    %c0_104 = arith.constant 0 : index
    %161 = vector.load %arg6[%c3_102, %c0_103, %c0_104] : memref<4x1x16xf32, #tpu.memory_space<vmem>>, vector<1x1x16xf32>
    %162 = vector.shape_cast %161 : vector<1x1x16xf32> to vector<1x16xf32>
    %163 = vector.broadcast %162 : vector<1x16xf32> to vector<16x16xf32>
    %164 = arith.addf %160, %163 : vector<16x16xf32>
    %cst_105 = arith.constant dense<0.000000e+00> : vector<16x16xf32>
    %165 = tpu.matmul %2, %154, %cst_105 {dimension_numbers = #tpu.dot_dimension_numbers<[1], [0], [0], [1], [0, 0, 1, 1], [], []>} : vector<16x64xbf16>, vector<64x16xbf16>, vector<16x16xf32> -> vector<16x16xf32>
    %c3_106 = arith.constant 3 : index
    %c0_107 = arith.constant 0 : index
    %c0_108 = arith.constant 0 : index
    %166 = vector.load %arg7[%c3_106, %c0_107, %c0_108] : memref<4x1x16xf32, #tpu.memory_space<vmem>>, vector<1x1x16xf32>
    %167 = vector.shape_cast %166 : vector<1x1x16xf32> to vector<1x16xf32>
    %168 = vector.broadcast %167 : vector<1x16xf32> to vector<16x16xf32>
    %169 = arith.addf %165, %168 : vector<16x16xf32>
    %170 = arith.truncf %159 : vector<16x16xf32> to vector<16x16xbf16>
    %171 = arith.truncf %164 : vector<16x16xf32> to vector<16x16xbf16>
    %cst_109 = arith.constant dense<0.000000e+00> : vector<16x16xf32>
    %172 = tpu.matmul %170, %171, %cst_109 {dimension_numbers = #tpu.dot_dimension_numbers<[1], [1], [0], [0], [0, 0, 1, 0], [], []>} : vector<16x16xbf16>, vector<16x16xbf16>, vector<16x16xf32> -> vector<16x16xf32>
    %cst_110 = arith.constant 2.500000e-01 : f32
    %173 = vector.broadcast %cst_110 : f32 to vector<16x16xf32>
    %174 = arith.mulf %172, %173 : vector<16x16xf32>
    %cst_111 = arith.constant dense<0xFF800000> : vector<16xf32>
    %175 = vector.multi_reduction <maximumf>, %174, %cst_111 [1] : vector<16x16xf32> to vector<16xf32>
    %176 = vector.shape_cast %175 : vector<16xf32> to vector<16x1xf32>
    %177 = vector.broadcast %176 : vector<16x1xf32> to vector<16x16xf32>
    %178 = arith.subf %174, %177 : vector<16x16xf32>
    %179 = math.exp %178 : vector<16x16xf32>
    %cst_112 = arith.constant dense<0.000000e+00> : vector<16xf32>
    %180 = vector.multi_reduction <add>, %179, %cst_112 [1] : vector<16x16xf32> to vector<16xf32>
    %181 = vector.shape_cast %180 : vector<16xf32> to vector<16x1xf32>
    %182 = arith.truncf %179 : vector<16x16xf32> to vector<16x16xbf16>
    %183 = arith.truncf %169 : vector<16x16xf32> to vector<16x16xbf16>
    %cst_113 = arith.constant dense<0.000000e+00> : vector<16x16xf32>
    %184 = tpu.matmul %182, %183, %cst_113 {dimension_numbers = #tpu.dot_dimension_numbers<[1], [0], [0], [1], [0, 0, 1, 1], [], []>} : vector<16x16xbf16>, vector<16x16xbf16>, vector<16x16xf32> -> vector<16x16xf32>
    %185 = tpu.reciprocal %181 {approx = true} : vector<16x1xf32> -> vector<16x1xf32>
    %186 = vector.broadcast %185 : vector<16x1xf32> to vector<16x16xf32>
    %187 = arith.mulf %184, %186 : vector<16x16xf32>
    %188 = arith.truncf %187 : vector<16x16xf32> to vector<16x16xbf16>
    %c3_114 = arith.constant 3 : index
    %c0_115 = arith.constant 0 : index
    %c0_116 = arith.constant 0 : index
    %189 = vector.load %arg8[%c3_114, %c0_115, %c0_116] : memref<4x16x64xf32, #tpu.memory_space<vmem>>, vector<1x16x64xf32>
    %190 = vector.shape_cast %189 : vector<1x16x64xf32> to vector<16x64xf32>
    %191 = arith.truncf %190 : vector<16x64xf32> to vector<16x64xbf16>
    %cst_117 = arith.constant dense<0.000000e+00> : vector<16x64xf32>
    %192 = tpu.matmul %188, %191, %cst_117 {dimension_numbers = #tpu.dot_dimension_numbers<[1], [0], [0], [1], [0, 0, 1, 1], [], []>} : vector<16x16xbf16>, vector<16x64xbf16>, vector<16x64xf32> -> vector<16x64xf32>
    %193 = arith.addf %145, %192 : vector<16x64xf32>
    %c0_118 = arith.constant 0 : index
    %c0_119 = arith.constant 0 : index
    %194 = vector.load %arg9[%c0_118, %c0_119] : memref<1x64xf32, #tpu.memory_space<vmem>>, vector<1x64xf32>
    %195 = vector.broadcast %194 : vector<1x64xf32> to vector<16x64xf32>
    %196 = arith.addf %193, %195 : vector<16x64xf32>
    %c0_120 = arith.constant 0 : index
    %c0_121 = arith.constant 0 : index
    %c0_122 = arith.constant 0 : index
    %197 = vector.load %arg10[%c0_120, %c0_121, %c0_122] : memref<1x16x64xf32, #tpu.memory_space<vmem>>, vector<1x16x64xf32>
    %198 = vector.shape_cast %197 : vector<1x16x64xf32> to vector<16x64xf32>
    %199 = vector.shape_cast %196 : vector<16x64xf32> to vector<1x16x64xf32>
    tpu.vector_store %arg10[%c0_120, %c0_121, %c0_122], %199 {strides = array<i32>} : memref<1x16x64xf32, #tpu.memory_space<vmem>>, vector<1x16x64xf32>,
    return
  }
  func.func @transform_0(%arg0: i32) -> (i32, i32, i32) {
    %c0_i32 = arith.constant 0 : i32
    %c0_i32_0 = arith.constant 0 : i32
    %c0_i32_1 = arith.constant 0 : i32
    return %arg0, %c0_i32, %c0_i32_0 : i32, i32, i32
  }
  func.func @transform_1(%arg0: i32) -> (i32, i32, i32) {
    %c0_i32 = arith.constant 0 : i32
    %c0_i32_0 = arith.constant 0 : i32
    %c0_i32_1 = arith.constant 0 : i32
    %c0_i32_2 = arith.constant 0 : i32
    return %c0_i32, %c0_i32_0, %c0_i32_1 : i32, i32, i32
  }
  func.func @transform_2(%arg0: i32) -> (i32, i32, i32) {
    %c0_i32 = arith.constant 0 : i32
    %c0_i32_0 = arith.constant 0 : i32
    %c0_i32_1 = arith.constant 0 : i32
    %c0_i32_2 = arith.constant 0 : i32
    return %c0_i32, %c0_i32_0, %c0_i32_1 : i32, i32, i32
  }
  func.func @transform_3(%arg0: i32) -> (i32, i32, i32) {
    %c0_i32 = arith.constant 0 : i32
    %c0_i32_0 = arith.constant 0 : i32
    %c0_i32_1 = arith.constant 0 : i32
    %c0_i32_2 = arith.constant 0 : i32
    return %c0_i32, %c0_i32_0, %c0_i32_1 : i32, i32, i32
  }
  func.func @transform_4(%arg0: i32) -> (i32, i32, i32) {
    %c0_i32 = arith.constant 0 : i32
    %c0_i32_0 = arith.constant 0 : i32
    %c0_i32_1 = arith.constant 0 : i32
    %c0_i32_2 = arith.constant 0 : i32
    return %c0_i32, %c0_i32_0, %c0_i32_1 : i32, i32, i32
  }
  func.func @transform_5(%arg0: i32) -> (i32, i32, i32) {
    %c0_i32 = arith.constant 0 : i32
    %c0_i32_0 = arith.constant 0 : i32
    %c0_i32_1 = arith.constant 0 : i32
    %c0_i32_2 = arith.constant 0 : i32
    return %c0_i32, %c0_i32_0, %c0_i32_1 : i32, i32, i32
  }
  func.func @transform_6(%arg0: i32) -> (i32, i32, i32) {
    %c0_i32 = arith.constant 0 : i32
    %c0_i32_0 = arith.constant 0 : i32
    %c0_i32_1 = arith.constant 0 : i32
    %c0_i32_2 = arith.constant 0 : i32
    return %c0_i32, %c0_i32_0, %c0_i32_1 : i32, i32, i32
  }
  func.func @transform_7(%arg0: i32) -> (i32, i32, i32) {
    %c0_i32 = arith.constant 0 : i32
    %c0_i32_0 = arith.constant 0 : i32
    %c0_i32_1 = arith.constant 0 : i32
    %c0_i32_2 = arith.constant 0 : i32
    return %c0_i32, %c0_i32_0, %c0_i32_1 : i32, i32, i32
  }
  func.func @transform_8(%arg0: i32) -> (i32, i32) {
    %c0_i32 = arith.constant 0 : i32
    %c0_i32_0 = arith.constant 0 : i32
    %c0_i32_1 = arith.constant 0 : i32
    return %c0_i32, %c0_i32_0 : i32, i32
  }
  func.func @transform_9(%arg0: i32) -> (i32, i32, i32) {
    %c0_i32 = arith.constant 0 : i32
    %c0_i32_0 = arith.constant 0 : i32
    %c0_i32_1 = arith.constant 0 : i32
    return %arg0, %c0_i32, %c0_i32_0 : i32, i32, i32
  }
}

</mosaic_0001>

<llo_original>
// kernel: tpu_custom_call.1
$region0: #{tpu_custom_call.1}
  #allocation0 [shape = 'u32[]', space=smem, size = 0x4, offset = 0x4, fixed_abs, tag = 'smem constant byte address 0x4 - core index']
  #allocation1 [shape = 'u32[144,128]{1,0:T(1,128)}', space=vmem, size = 0x12000, scoped, tag = 'internal scratch']
  %s0 = inlined_call_operand.vmem [shape: f32[2,16,64], index: 0, kind: input, shape index: {}]
  %s1 = inlined_call_operand.vmem [shape: f32[4,64,16], index: 1, kind: input, shape index: {}]
  %s2 = inlined_call_operand.vmem [shape: f32[4,64,16], index: 2, kind: input, shape index: {}]
  %s3 = inlined_call_operand.vmem [shape: f32[4,64,16], index: 3, kind: input, shape index: {}]
  %s4 = inlined_call_operand.vmem [shape: f32[4,1,16], index: 4, kind: input, shape index: {}]
  %s5 = inlined_call_operand.vmem [shape: f32[4,1,16], index: 5, kind: input, shape index: {}]
  %s6 = inlined_call_operand.vmem [shape: f32[4,1,16], index: 6, kind: input, shape index: {}]
  %s7 = inlined_call_operand.vmem [shape: f32[4,16,64], index: 7, kind: input, shape index: {}]
  %s8 = inlined_call_operand.vmem [shape: f32[1,64], index: 8, kind: input, shape index: {}]
  %s9 = inlined_call_operand.hbm [shape: f32[2,16,64], index: 9, kind: output, shape index: {}]
  %s10 = sld [smem:[#allocation0]]
  $region69: #{tpu_custom_call.1} parent=0
    _
  %s12 = ssub.s32 1, %s10
  %s13 = scalar_select 0, %s12, %s10
  $region1: #{tpu_custom_call.1} parent=0
    #allocation2 [shape = 'u8[16384]{0}', space=vmem, size = 0x4000, scoped, tag = 'output window, operand 0']
    #allocation3 [shape = 's32[2]{0}', space=sflag, size = 0x8, scoped, tag = 'scoped memory for tpu_custom_call.1']
    %14 = vsyncpa [#allocation3], 0
    %s15 = scalar_lea.sflag [#allocation3], 1
    %16 = vsyncpa %s15, 0
    loop: start=0, step=1, limit=4
    $region2: #{tpu_custom_call.1} parent=1 // loop_pre_header
      _
    $region3: #{tpu_custom_call.1} parent=1 // loop_header
      %s18 = sphi 0, %s22
      %p19 = scmp.ge.s32.totalorder %s18, 4
      %s28 = sphi 0, %s30
      %s31 = sphi 0, %s28
      %s32 = sphi 0, %s31
      %s48 = sphi 0, %s32
      %s52 = sphi 0, %s52
      %s54 = sphi 0, %s52
      %s55 = sphi 0, %s54
      %s69 = sphi 0, %s55
      %s73 = sphi 0, %s73
      %s75 = sphi 0, %s73
      %s76 = sphi 0, %s75
      %s90 = sphi 0, %s76
      %s94 = sphi 0, %s94
      %s96 = sphi 0, %s94
      %s97 = sphi 0, %s96
      %s111 = sphi 0, %s97
      %s115 = sphi 0, %s115
      %s117 = sphi 0, %s115
      %s118 = sphi 0, %s117
      %s132 = sphi 0, %s118
      %s136 = sphi 0, %s136
      %s138 = sphi 0, %s136
      %s139 = sphi 0, %s138
      %s153 = sphi 0, %s139
      %s157 = sphi 0, %s157
      %s159 = sphi 0, %s157
      %s160 = sphi 0, %s159
      %s174 = sphi 0, %s160
      %s178 = sphi 0, %s178
      %s180 = sphi 0, %s178
      %s181 = sphi 0, %s180
      %s195 = sphi 0, %s181
      %s199 = sphi 0, %s199
      %s201 = sphi 0, %s199
      %s202 = sphi 0, %s201
      %s216 = sphi 0, %s202
      %s222 = sphi 0, %s224
      %s225 = sphi 0, %s222
      %s226 = sphi 0, %s225
      %s242 = sphi 0, %s226
    $region4: #{tpu_custom_call.1} parent=1 // loop_header_branch
      %21 = sbr.rel (%p19) target = $region8
    $region5: #{tpu_custom_call.1} parent=1 // loop_body
      %s23 = ssub.s32 %s18, 1
      %s24 = ssub.s32 %s18, 2
      %s25 = sadd.s32 %s18, 1
      %s26 = ssub.s32 %s18, %s25
      %p27 = scmp.eq.s32.totalorder %s26, 0
      %s29 = sadd.s32 %s28, 1
      %s30 = scalar_select %p27, %s28, %s29
      %p33 = pneg %p27
      %p34 = scmp.eq.s32.totalorder %s18, 1
      %p35 = por %p33, %p34
      %p36 = scmp.ne.s32.totalorder %s28, %s31
      %p37 = scmp.eq.s32.totalorder %s18, 0
      %p38 = por %p36, %p37
      %p39 = scmp.ne.s32.totalorder %s28, %s31
      %p40 = scmp.eq.s32.totalorder %s23, 1
      %p41 = por %p39, %p40
      %p42 = scmp.ne.s32.totalorder %s31, %s32
      %p43 = scmp.eq.s32.totalorder %s23, 0
      %p44 = por %p42, %p43
      %p45 = scmp.ne.s32.totalorder %s31, %s32
      %p46 = scmp.eq.s32.totalorder %s24, 1
      %p47 = por %p45, %p46
      %p49 = scmp.ne.s32.totalorder %s32, %s48
      %p50 = scmp.eq.s32.totalorder %s24, 0
      %p51 = por %p49, %p50
      %s53 = sadd.s32 %s52, 1
      %p56 = scmp.eq.s32.totalorder %s18, 1
      %p57 = scmp.ne.s32.totalorder %s52, %s54
      %p58 = scmp.eq.s32.totalorder %s18, 0
      %p59 = por %p57, %p58
      %p60 = scmp.ne.s32.totalorder %s52, %s54
      %p61 = scmp.eq.s32.totalorder %s23, 1
      %p62 = por %p60, %p61
      %p63 = scmp.ne.s32.totalorder %s54, %s55
      %p64 = scmp.eq.s32.totalorder %s23, 0
      %p65 = por %p63, %p64
      %p66 = scmp.ne.s32.totalorder %s54, %s55
      %p67 = scmp.eq.s32.totalorder %s24, 1
      %p68 = por %p66, %p67
      %p70 = scmp.ne.s32.totalorder %s55, %s69
      %p71 = scmp.eq.s32.totalorder %s24, 0
      %p72 = por %p70, %p71
      %s74 = sadd.s32 %s73, 1
      %p77 = scmp.eq.s32.totalorder %s18, 1
      %p78 = scmp.ne.s32.totalorder %s73, %s75
      %p79 = scmp.eq.s32.totalorder %s18, 0
      %p80 = por %p78, %p79
      %p81 = scmp.ne.s32.totalorder %s73, %s75
      %p82 = scmp.eq.s32.totalorder %s23, 1
      %p83 = por %p81, %p82
      %p84 = scmp.ne.s32.totalorder %s75, %s76
      %p85 = scmp.eq.s32.totalorder %s23, 0
      %p86 = por %p84, %p85
      %p87 = scmp.ne.s32.totalorder %s75, %s76
      %p88 = scmp.eq.s32.totalorder %s24, 1
      %p89 = por %p87, %p88
      %p91 = scmp.ne.s32.totalorder %s76, %s90
      %p92 = scmp.eq.s32.totalorder %s24, 0
      %p93 = por %p91, %p92
      %s95 = sadd.s32 %s94, 1
      %p98 = scmp.eq.s32.totalorder %s18, 1
      %p99 = scmp.ne.s32.totalorder %s94, %s96
      %p100 = scmp.eq.s32.totalorder %s18, 0
      %p101 = por %p99, %p100
      %p102 = scmp.ne.s32.totalorder %s94, %s96
      %p103 = scmp.eq.s32.totalorder %s23, 1
      %p104 = por %p102, %p103
      %p105 = scmp.ne.s32.totalorder %s96, %s97
      %p106 = scmp.eq.s32.totalorder %s23, 0
      %p107 = por %p105, %p106
      %p108 = scmp.ne.s32.totalorder %s96, %s97
      %p109 = scmp.eq.s32.totalorder %s24, 1
      %p110 = por %p108, %p109
      %p112 = scmp.ne.s32.totalorder %s97, %s111
      %p113 = scmp.eq.s32.totalorder %s24, 0
      %p114 = por %p112, %p113
      %s116 = sadd.s32 %s115, 1
      %p119 = scmp.eq.s32.totalorder %s18, 1
      %p120 = scmp.ne.s32.totalorder %s115, %s117
      %p121 = scmp.eq.s32.totalorder %s18, 0
      %p122 = por %p120, %p121
      %p123 = scmp.ne.s32.totalorder %s115, %s117
      %p124 = scmp.eq.s32.totalorder %s23, 1
      %p125 = por %p123, %p124
      %p126 = scmp.ne.s32.totalorder %s117, %s118
      %p127 = scmp.eq.s32.totalorder %s23, 0
      %p128 = por %p126, %p127
      %p129 = scmp.ne.s32.totalorder %s117, %s118
      %p130 = scmp.eq.s32.totalorder %s24, 1
      %p131 = por %p129, %p130
      %p133 = scmp.ne.s32.totalorder %s118, %s132
      %p134 = scmp.eq.s32.totalorder %s24, 0
      %p135 = por %p133, %p134
      %s137 = sadd.s32 %s136, 1
      %p140 = scmp.eq.s32.totalorder %s18, 1
      %p141 = scmp.ne.s32.totalorder %s136, %s138
      %p142 = scmp.eq.s32.totalorder %s18, 0
      %p143 = por %p141, %p142
      %p144 = scmp.ne.s32.totalorder %s136, %s138
      %p145 = scmp.eq.s32.totalorder %s23, 1
      %p146 = por %p144, %p145
      %p147 = scmp.ne.s32.totalorder %s138, %s139
      %p148 = scmp.eq.s32.totalorder %s23, 0
      %p149 = por %p147, %p148
      %p150 = scmp.ne.s32.totalorder %s138, %s139
      %p151 = scmp.eq.s32.totalorder %s24, 1
      %p152 = por %p150, %p151
      %p154 = scmp.ne.s32.totalorder %s139, %s153
      %p155 = scmp.eq.s32.totalorder %s24, 0
      %p156 = por %p154, %p155
      %s158 = sadd.s32 %s157, 1
      %p161 = scmp.eq.s32.totalorder %s18, 1
      %p162 = scmp.ne.s32.totalorder %s157, %s159
      %p163 = scmp.eq.s32.totalorder %s18, 0
      %p164 = por %p162, %p163
      %p165 = scmp.ne.s32.totalorder %s157, %s159
      %p166 = scmp.eq.s32.totalorder %s23, 1
      %p167 = por %p165, %p166
      %p168 = scmp.ne.s32.totalorder %s159, %s160
      %p169 = scmp.eq.s32.totalorder %s23, 0
      %p170 = por %p168, %p169
      %p171 = scmp.ne.s32.totalorder %s159, %s160
      %p172 = scmp.eq.s32.totalorder %s24, 1
      %p173 = por %p171, %p172
      %p175 = scmp.ne.s32.totalorder %s160, %s174
      %p176 = scmp.eq.s32.totalorder %s24, 0
      %p177 = por %p175, %p176
      %s179 = sadd.s32 %s178, 1
      %p182 = scmp.eq.s32.totalorder %s18, 1
      %p183 = scmp.ne.s32.totalorder %s178, %s180
      %p184 = scmp.eq.s32.totalorder %s18, 0
      %p185 = por %p183, %p184
      %p186 = scmp.ne.s32.totalorder %s178, %s180
      %p187 = scmp.eq.s32.totalorder %s23, 1
      %p188 = por %p186, %p187
      %p189 = scmp.ne.s32.totalorder %s180, %s181
      %p190 = scmp.eq.s32.totalorder %s23, 0
      %p191 = por %p189, %p190
      %p192 = scmp.ne.s32.totalorder %s180, %s181
      %p193 = scmp.eq.s32.totalorder %s24, 1
      %p194 = por %p192, %p193
      %p196 = scmp.ne.s32.totalorder %s181, %s195
      %p197 = scmp.eq.s32.totalorder %s24, 0
      %p198 = por %p196, %p197
      %s200 = sadd.s32 %s199, 1
      %p203 = scmp.eq.s32.totalorder %s18, 1
      %p204 = scmp.ne.s32.totalorder %s199, %s201
      %p205 = scmp.eq.s32.totalorder %s18, 0
      %p206 = por %p204, %p205
      %p207 = scmp.ne.s32.totalorder %s199, %s201
      %p208 = scmp.eq.s32.totalorder %s23, 1
      %p209 = por %p207, %p208
      %p210 = scmp.ne.s32.totalorder %s201, %s202
      %p211 = scmp.eq.s32.totalorder %s23, 0
      %p212 = por %p210, %p211
      %p213 = scmp.ne.s32.totalorder %s201, %s202
      %p214 = scmp.eq.s32.totalorder %s24, 1
      %p215 = por %p213, %p214
      %p217 = scmp.ne.s32.totalorder %s202, %s216
      %p218 = scmp.eq.s32.totalorder %s24, 0
      %p219 = por %p217, %p218
      %s220 = ssub.s32 %s18, %s25
      %p221 = scmp.eq.s32.totalorder %s220, 0
      %s223 = sadd.s32 %s222, 1
      %s224 = scalar_select %p221, %s222, %s223
      %p227 = pneg %p221
      %p228 = scmp.eq.s32.totalorder %s18, 1
      %p229 = por %p227, %p228
      %p230 = scmp.ne.s32.totalorder %s222, %s225
      %p231 = scmp.eq.s32.totalorder %s18, 0
      %p232 = por %p230, %p231
      %p233 = scmp.ne.s32.totalorder %s222, %s225
      %p234 = scmp.eq.s32.totalorder %s23, 1
      %p235 = por %p233, %p234
      %p236 = scmp.ne.s32.totalorder %s225, %s226
      %p237 = scmp.eq.s32.totalorder %s23, 0
      %p238 = por %p236, %p237
      %p239 = scmp.ne.s32.totalorder %s225, %s226
      %p240 = scmp.eq.s32.totalorder %s24, 1
      %p241 = por %p239, %p240
      %p243 = scmp.ne.s32.totalorder %s226, %s242
      %p244 = scmp.eq.s32.totalorder %s24, 0
      %p245 = por %p243, %p244
      %p246 = scmp.le.s32.totalorder 1, %s18
      %p247 = scmp.lt.s32.totalorder %s18, 3
      %p248 = pnand %p246, %p247
      %p249 = pneg %p248
      // Predicated region
      $region9: #{tpu_custom_call.1} parent=5 // pred_check
        _
      $region10: #{tpu_custom_call.1} parent=5 // pred_check_branch
        %251 = sbr.rel (%p248) target = $region12
      $region11: #{tpu_custom_call.1} parent=5 // pred_region
        %s252 = ssub.s32 %s18, 1
        // Predicated region
        $region13: #{tpu_custom_call.1} parent=11 // pred_check
          %p253 = pneg %p65
        $region14: #{tpu_custom_call.1} parent=11 // pred_check_branch
          %255 = sbr.rel (%p253) target = $region16
        $region15: #{tpu_custom_call.1} parent=11 // pred_region
          _
        $region16: #{tpu_custom_call.1} parent=11 // pred_fallthru
          _
        // Predicated region
        $region17: #{tpu_custom_call.1} parent=11 // pred_check
          %p256 = pneg %p86
        $region18: #{tpu_custom_call.1} parent=11 // pred_check_branch
          %258 = sbr.rel (%p256) target = $region20
        $region19: #{tpu_custom_call.1} parent=11 // pred_region
          _
        $region20: #{tpu_custom_call.1} parent=11 // pred_fallthru
          _
        // Predicated region
        $region21: #{tpu_custom_call.1} parent=11 // pred_check
          %p259 = pneg %p107
        $region22: #{tpu_custom_call.1} parent=11 // pred_check_branch
          %261 = sbr.rel (%p259) target = $region24
        $region23: #{tpu_custom_call.1} parent=11 // pred_region
          _
        $region24: #{tpu_custom_call.1} parent=11 // pred_fallthru
          _
        // Predicated region
        $region25: #{tpu_custom_call.1} parent=11 // pred_check
          %p262 = pneg %p128
        $region26: #{tpu_custom_call.1} parent=11 // pred_check_branch
          %264 = sbr.rel (%p262) target = $region28
        $region27: #{tpu_custom_call.1} parent=11 // pred_region
          _
        $region28: #{tpu_custom_call.1} parent=11 // pred_fallthru
          _
        // Predicated region
        $region29: #{tpu_custom_call.1} parent=11 // pred_check
          %p265 = pneg %p149
        $region30: #{tpu_custom_call.1} parent=11 // pred_check_branch
          %267 = sbr.rel (%p265) target = $region32
        $region31: #{tpu_custom_call.1} parent=11 // pred_region
          _
        $region32: #{tpu_custom_call.1} parent=11 // pred_fallthru
          _
        // Predicated region
        $region33: #{tpu_custom_call.1} parent=11 // pred_check
          %p268 = pneg %p170
        $region34: #{tpu_custom_call.1} parent=11 // pred_check_branch
          %270 = sbr.rel (%p268) target = $region36
        $region35: #{tpu_custom_call.1} parent=11 // pred_region
          _
        $region36: #{tpu_custom_call.1} parent=11 // pred_fallthru
          _
        // Predicated region
        $region37: #{tpu_custom_call.1} parent=11 // pred_check
          %p271 = pneg %p191
        $region38: #{tpu_custom_call.1} parent=11 // pred_check_branch
          %273 = sbr.rel (%p271) target = $region40
        $region39: #{tpu_custom_call.1} parent=11 // pred_region
          _
        $region40: #{tpu_custom_call.1} parent=11 // pred_fallthru
          _
        // Predicated region
        $region41: #{tpu_custom_call.1} parent=11 // pred_check
          %p274 = pneg %p212
        $region42: #{tpu_custom_call.1} parent=11 // pred_check_branch
          %276 = sbr.rel (%p274) target = $region44
        $region43: #{tpu_custom_call.1} parent=11 // pred_region
          _
        $region44: #{tpu_custom_call.1} parent=11 // pred_fallthru
          _
      $region12: #{tpu_custom_call.1} parent=5 // pred_fallthru
        _
      %p277 = scmp.lt.s32.totalorder %s18, 2
      // Predicated region
      $region45: #{tpu_custom_call.1} parent=5 // pred_check
        %p278 = pneg %p277
      $region46: #{tpu_custom_call.1} parent=5 // pred_check_branch
        %280 = sbr.rel (%p278) target = $region48
      $region47: #{tpu_custom_call.1} parent=5 // pred_region
        // Predicated region
        $region49: #{tpu_custom_call.1} parent=47 // pred_check
          %p281 = pneg %p38
        $region50: #{tpu_custom_call.1} parent=47 // pred_check_branch
          %283 = sbr.rel (%p281) target = $region52
        $region51: #{tpu_custom_call.1} parent=47 // pred_region
          %p284 = scmp.lt.s32.totalorder %s18, 1
          %s285 = scalar_select %p284, %s18, 1
          %s286 = smul.addr %s285, 2
          %s287 = smul.addr %s286, 8
          %s288 = scalar_lea.vmem %s0, %s287
        $region52: #{tpu_custom_call.1} parent=47 // pred_fallthru
          _
      $region48: #{tpu_custom_call.1} parent=5 // pred_fallthru
        _
      %p289 = scmp.le.s32.totalorder 1, %s18
      %p290 = scmp.lt.s32.totalorder %s18, 3
      %p291 = pnand %p289, %p290
      %p292 = pneg %p291
      // Predicated region
      $region53: #{tpu_custom_call.1} parent=5 // pred_check
        _
      $region54: #{tpu_custom_call.1} parent=5 // pred_check_branch
        %294 = sbr.rel (%p291) target = $region56
      $region55: #{tpu_custom_call.1} parent=5 // pred_region
        %s295 = ssub.s32 %s18, 1
        %p296 = scmp.lt.s32.totalorder %s23, 1
        %s297 = scalar_select %p296, %s23, 1
        %s298 = smul.addr %s297, 2
        %s299 = smul.addr %s298, 8
        %s300 = scalar_lea.vmem %s0, %s299
        %p301 = pneg %p44
        %p302 = pneg %p41
        %p303 = pneg %p65
        %p304 = pneg %p62
        %p305 = pneg %p86
        %p306 = pneg %p83
        %p307 = pneg %p107
        %p308 = pneg %p104
        %p309 = pneg %p128
        %p310 = pneg %p125
        %p311 = pneg %p149
        %p312 = pneg %p146
        %p313 = pneg %p170
        %p314 = pneg %p167
        %p315 = pneg %p191
        %p316 = pneg %p188
        %p317 = pneg %p212
        %p318 = pneg %p209
        %p319 = pneg %p238
        %p320 = pneg %p235
        %s321 = sand.u32 %s225, 1
        %s322 = scalar_lea.sflag [#allocation3], %s321
        %s323 = sand.u32 %s225, 1
        %s324 = smul.addr %s323, 16
        %s325 = scalar_lea.vmem [#allocation2], %s324
        %p326 = scmp.lt.s32.totalorder %s23, 1
        %s327 = scalar_select %p326, %s23, 1
        %s328 = smul.addr %s327, 2
        %s329 = smul.addr %s328, 8
        %s330 = scalar_lea.vmem %s0, %s329
        %v332 = vld [vmem:[%s330] sm:$0xff]
        %v333 = vld [vmem:[%s330 + $0x8] sm:$0xff]
        %v334 = vpack.c.bf16 %v333, %v332
        %v335 = vld [vmem:[%s1] sm:$0xff]
        %v336 = vld [vmem:[%s1 + $0x8] sm:$0xff]
        %v337 = vld [vmem:[%s1 + $0x10] sm:$0xff]
        %v338 = vld [vmem:[%s1 + $0x18] sm:$0xff]
        %v339 = vld [vmem:[%s1 + $0x20] sm:$0xff]
        %v340 = vld [vmem:[%s1 + $0x28] sm:$0xff]
        %v341 = vld [vmem:[%s1 + $0x30] sm:$0xff]
        %v342 = vld [vmem:[%s1 + $0x38] sm:$0xff]
        %v343 = vpack.c.bf16 %v336, %v335
        %v344 = vpack.c.bf16 %v338, %v337
        %v345 = vpack.c.bf16 %v340, %v339
        %v346 = vpack.c.bf16 %v342, %v341
        %v347 = vld [vmem:[%s2] sm:$0xff]
        %v348 = vld [vmem:[%s2 + $0x8] sm:$0xff]
        %v349 = vld [vmem:[%s2 + $0x10] sm:$0xff]
        %v350 = vld [vmem:[%s2 + $0x18] sm:$0xff]
        %v351 = vld [vmem:[%s2 + $0x20] sm:$0xff]
        %v352 = vld [vmem:[%s2 + $0x28] sm:$0xff]
        %v353 = vld [vmem:[%s2 + $0x30] sm:$0xff]
        %v354 = vld [vmem:[%s2 + $0x38] sm:$0xff]
        %v355 = vpack.c.bf16 %v348, %v347
        %v356 = vpack.c.bf16 %v350, %v349
        %v357 = vpack.c.bf16 %v352, %v351
        %v358 = vpack.c.bf16 %v354, %v353
        %v359 = vld [vmem:[%s3] sm:$0xff]
        %v360 = vld [vmem:[%s3 + $0x8] sm:$0xff]
        %v361 = vld [vmem:[%s3 + $0x10] sm:$0xff]
        %v362 = vld [vmem:[%s3 + $0x18] sm:$0xff]
        %v363 = vld [vmem:[%s3 + $0x20] sm:$0xff]
        %v364 = vld [vmem:[%s3 + $0x28] sm:$0xff]
        %v365 = vld [vmem:[%s3 + $0x30] sm:$0xff]
        %v366 = vld [vmem:[%s3 + $0x38] sm:$0xff]
        %v367 = vpack.c.bf16 %v360, %v359
        %v368 = vpack.c.bf16 %v362, %v361
        %v369 = vpack.c.bf16 %v364, %v363
        %v370 = vpack.c.bf16 %v366, %v365
        %v371 = vld [vmem:[%s4] sm:$0x1]
        %v373 = vlaneseq
        %v374 = vshrl.u32 %v373, 7
        %v375 = vsub.s32 0, %v374
        %v376 = vrot.slane %v371, %v375
        %vm378 = vcmask 523264
        %v380 = vsel %vm378, %v334, 0
        %382 = vmatprep.subr.bf16.mxu0 0
        %383 = vmatpush1.bf16.msra.mxu0 0
        %384 = vmatprep.subr.bf16.mxu0 0
        %385 = vmatpush1.bf16.msra.mxu0 0
        %386 = vmatprep.subr.bf16.mxu0 0
        %387 = vmatpush1.bf16.msra.mxu0 0
        %388 = vmatprep.subr.bf16.mxu0 0
        %389 = vmatpush1.bf16.msra.mxu0 0
        %390 = vmatprep.subr.bf16.mxu0 0
        %391 = vmatpush1.bf16.msra.mxu0 %v346
        %392 = vmatprep.subr.bf16.mxu0 0
        %393 = vmatpush1.bf16.msra.mxu0 %v345
        %394 = vmatprep.subr.bf16.mxu0 0
        %395 = vmatpush1.bf16.msra.mxu0 %v344
        %396 = vmatprep.subr.bf16.mxu0 0
        %397 = vmatpush1.bf16.msra.mxu0 %v343
        %398 = vmatprep.subr.bf16.mxu0 0
        %399 = vmatpush2.bf16.msra.mxu0 0
        %400 = vmatprep.subr.bf16.mxu0 0
        %401 = vmatpush2.bf16.msra.mxu0 0
        %402 = vmatprep.subr.bf16.mxu0 0
        %403 = vmatpush2.bf16.msra.mxu0 0
        %404 = vmatprep.subr.bf16.mxu0 0
        %405 = vmatpush2.bf16.msra.mxu0 0
        %406 = vmatprep.subr.bf16.mxu0 0
        %407 = vmatpush2.bf16.msra.mxu0 0
        %408 = vmatprep.subr.bf16.mxu0 0
        %409 = vmatpush2.bf16.msra.mxu0 0
        %410 = vmatprep.subr.bf16.mxu0 0
        %411 = vmatpush2.bf16.msra.mxu0 0
        %412 = vmatprep.subr.bf16.mxu0 0
        %413 = vmatpush2.bf16.msra.mxu0 0
        %414 = vmatprep.mubr.bf16.mxu0 0
        %415 = vmatmul.mubr.bf16.gmra.mxu0 %v380
        %v416 = vpop.f32.mrf.mxu0
        %v417 = vadd.f32 %v376, %v416
        %v418 = vpop.f32.mrf.mxu0
        %v419 = vpop.f32.mrf.mxu0
        %v420 = vadd.f32 %v376, %v419
        %v421 = vpop.f32.mrf.mxu0
        %422 = vdwg.mxu0
        %v423 = vld [vmem:[%s5] sm:$0x1]
        %v425 = vlaneseq
        %v426 = vshrl.u32 %v425, 7
        %v427 = vsub.s32 0, %v426
        %v428 = vrot.slane %v423, %v427
        %430 = vmatprep.subr.bf16.mxu0 0
        %431 = vmatpush1.bf16.msra.mxu0 0
        %432 = vmatprep.subr.bf16.mxu0 0
        %433 = vmatpush1.bf16.msra.mxu0 0
        %434 = vmatprep.subr.bf16.mxu0 0
        %435 = vmatpush1.bf16.msra.mxu0 0
        %436 = vmatprep.subr.bf16.mxu0 0
        %437 = vmatpush1.bf16.msra.mxu0 0
        %438 = vmatprep.subr.bf16.mxu0 0
        %439 = vmatpush1.bf16.msra.mxu0 %v358
        %440 = vmatprep.subr.bf16.mxu0 0
        %441 = vmatpush1.bf16.msra.mxu0 %v357
        %442 = vmatprep.subr.bf16.mxu0 0
        %443 = vmatpush1.bf16.msra.mxu0 %v356
        %444 = vmatprep.subr.bf16.mxu0 0
        %445 = vmatpush1.bf16.msra.mxu0 %v355
        %446 = vmatprep.subr.bf16.mxu0 0
        %447 = vmatpush2.bf16.msra.mxu0 0
        %448 = vmatprep.subr.bf16.mxu0 0
        %449 = vmatpush2.bf16.msra.mxu0 0
        %450 = vmatprep.subr.bf16.mxu0 0
        %451 = vmatpush2.bf16.msra.mxu0 0
        %452 = vmatprep.subr.bf16.mxu0 0
        %453 = vmatpush2.bf16.msra.mxu0 0
        %454 = vmatprep.subr.bf16.mxu0 0
        %455 = vmatpush2.bf16.msra.mxu0 0
        %456 = vmatprep.subr.bf16.mxu0 0
        %457 = vmatpush2.bf16.msra.mxu0 0
        %458 = vmatprep.subr.bf16.mxu0 0
        %459 = vmatpush2.bf16.msra.mxu0 0
        %460 = vmatprep.subr.bf16.mxu0 0
        %461 = vmatpush2.bf16.msra.mxu0 0
        %462 = vmatprep.mubr.bf16.mxu0 0
        %463 = vmatmul.mubr.bf16.gmra.mxu0 %v380
        %v464 = vpop.f32.mrf.mxu0
        %v465 = vadd.f32 %v428, %v464
        %v466 = vpop.f32.mrf.mxu0
        %v467 = vpop.f32.mrf.mxu0
        %v468 = vadd.f32 %v428, %v467
        %v469 = vpop.f32.mrf.mxu0
        %470 = vdwg.mxu0
        %v471 = vld [vmem:[%s6] sm:$0x1]
        %v473 = vlaneseq
        %v474 = vshrl.u32 %v473, 7
        %v475 = vsub.s32 0, %v474
        %v476 = vrot.slane %v471, %v475
        %478 = vmatprep.subr.bf16.mxu0 0
        %479 = vmatpush1.bf16.msra.mxu0 0
        %480 = vmatprep.subr.bf16.mxu0 0
        %481 = vmatpush1.bf16.msra.mxu0 0
        %482 = vmatprep.subr.bf16.mxu0 0
        %483 = vmatpush1.bf16.msra.mxu0 0
        %484 = vmatprep.subr.bf16.mxu0 0
        %485 = vmatpush1.bf16.msra.mxu0 0
        %486 = vmatprep.subr.bf16.mxu0 0
        %487 = vmatpush1.bf16.msra.mxu0 %v370
        %488 = vmatprep.subr.bf16.mxu0 0
        %489 = vmatpush1.bf16.msra.mxu0 %v369
        %490 = vmatprep.subr.bf16.mxu0 0
        %491 = vmatpush1.bf16.msra.mxu0 %v368
        %492 = vmatprep.subr.bf16.mxu0 0
        %493 = vmatpush1.bf16.msra.mxu0 %v367
        %494 = vmatprep.subr.bf16.mxu0 0
        %495 = vmatpush2.bf16.msra.mxu0 0
        %496 = vmatprep.subr.bf16.mxu0 0
        %497 = vmatpush2.bf16.msra.mxu0 0
        %498 = vmatprep.subr.bf16.mxu0 0
        %499 = vmatpush2.bf16.msra.mxu0 0
        %500 = vmatprep.subr.bf16.mxu0 0
        %501 = vmatpush2.bf16.msra.mxu0 0
        %502 = vmatprep.subr.bf16.mxu0 0
        %503 = vmatpush2.bf16.msra.mxu0 0
        %504 = vmatprep.subr.bf16.mxu0 0
        %505 = vmatpush2.bf16.msra.mxu0 0
        %506 = vmatprep.subr.bf16.mxu0 0
        %507 = vmatpush2.bf16.msra.mxu0 0
        %508 = vmatprep.subr.bf16.mxu0 0
        %509 = vmatpush2.bf16.msra.mxu0 0
        %510 = vmatprep.mubr.bf16.mxu0 0
        %511 = vmatmul.mubr.bf16.gmra.mxu0 %v380
        %v512 = vpop.f32.mrf.mxu0
        %v513 = vadd.f32 %v476, %v512
        %v514 = vpop.f32.mrf.mxu0
        %v515 = vpop.f32.mrf.mxu0
        %v516 = vadd.f32 %v476, %v515
        %v517 = vpop.f32.mrf.mxu0
        %518 = vdwg.mxu0
        %v519 = vpack.c.bf16 %v420, %v417
        %v520 = vpack.c.bf16 %v468, %v465
        %vm521 = vcmask 130048
        %v523 = vsel %vm521, %v519, 0
        %v526 = vsel %vm521, %v520, 0
        %528 = vmatprep.subr.bf16.mxu0 0
        %529 = vmatpush1.bf16.xpose.msra.mxu0 0
        %530 = vmatprep.subr.bf16.mxu0 0
        %531 = vmatpush1.bf16.xpose.msra.mxu0 0
        %532 = vmatprep.subr.bf16.mxu0 0
        %533 = vmatpush1.bf16.xpose.msra.mxu0 0
        %534 = vmatprep.subr.bf16.mxu0 0
        %535 = vmatpush1.bf16.xpose.msra.mxu0 0
        %536 = vmatprep.subr.bf16.mxu0 0
        %537 = vmatpush1.bf16.xpose.msra.mxu0 0
        %538 = vmatprep.subr.bf16.mxu0 0
        %539 = vmatpush1.bf16.xpose.msra.mxu0 0
        %540 = vmatprep.subr.bf16.mxu0 0
        %541 = vmatpush1.bf16.xpose.msra.mxu0 0
        %542 = vmatprep.subr.bf16.mxu0 0
        %543 = vmatpush1.bf16.xpose.msra.mxu0 %v526
        %544 = vmatprep.subr.bf16.mxu0 0
        %545 = vmatpush2.bf16.xpose.msra.mxu0 0
        %546 = vmatprep.subr.bf16.mxu0 0
        %547 = vmatpush2.bf16.xpose.msra.mxu0 0
        %548 = vmatprep.subr.bf16.mxu0 0
        %549 = vmatpush2.bf16.xpose.msra.mxu0 0
        %550 = vmatprep.subr.bf16.mxu0 0
        %551 = vmatpush2.bf16.xpose.msra.mxu0 0
        %552 = vmatprep.subr.bf16.mxu0 0
        %553 = vmatpush2.bf16.xpose.msra.mxu0 0
        %554 = vmatprep.subr.bf16.mxu0 0
        %555 = vmatpush2.bf16.xpose.msra.mxu0 0
        %556 = vmatprep.subr.bf16.mxu0 0
        %557 = vmatpush2.bf16.xpose.msra.mxu0 0
        %558 = vmatprep.subr.bf16.mxu0 0
        %559 = vmatpush2.bf16.xpose.msra.mxu0 0
        %560 = vmatprep.mubr.bf16.mxu0 0
        %561 = vmatmul.mubr.bf16.gmra.mxu0 %v523
        %v562 = vpop.f32.mrf.mxu0
        %v563 = vadd.f32 0.0, %v562
        %v564 = vpop.f32.mrf.mxu0
        %v565 = vpop.f32.mrf.mxu0
        %v566 = vadd.f32 0.0, %v565
        %v567 = vpop.f32.mrf.mxu0
        %568 = vdwg.mxu0
        %v569 = vmul.f32 %v563, 0.25
        %v570 = vmul.f32 %v566, 0.25
        %v571 = vsel %vm521, %v569, -inf
        %572 = vmax.xlane.f32.xlu0 %v571
        %v573 = vpop.xlane.xlu0 %572
        %v574 = vsel %vm521, %v570, -inf
        %575 = vmax.xlane.f32.xlu0 %v574
        %v576 = vpop.xlane.xlu0 %575
        %v577 = vsub.f32 %v569, %v573
        %v578 = vsub.f32 %v570, %v576
        %v579 = vmul.f32 %v577, 1.442695
        %v580 = vpow.pop %v579
        %v581 = vmul.f32 %v578, 1.442695
        %v582 = vpow.pop %v581
        %v583 = vsel %vm521, %v580, 0.0
        %584 = vadd.xlane.f32.xlu0 %v583
        %v585 = vpop.xlane.xlu0 %584
        %v586 = vsel %vm521, %v582, 0.0
        %587 = vadd.xlane.f32.xlu0 %v586
        %v588 = vpop.xlane.xlu0 %587
        %v589 = vpack.c.bf16 %v582, %v580
        %v590 = vpack.c.bf16 %v516, %v513
        %v592 = vsel %vm521, %v589, 0
        %594 = vmatprep.subr.bf16.mxu0 0
        %595 = vmatpush1.bf16.msra.mxu0 0
        %596 = vmatprep.subr.bf16.mxu0 0
        %597 = vmatpush1.bf16.msra.mxu0 0
        %598 = vmatprep.subr.bf16.mxu0 0
        %599 = vmatpush1.bf16.msra.mxu0 0
        %600 = vmatprep.subr.bf16.mxu0 0
        %601 = vmatpush1.bf16.msra.mxu0 0
        %602 = vmatprep.subr.bf16.mxu0 0
        %603 = vmatpush1.bf16.msra.mxu0 0
        %604 = vmatprep.subr.bf16.mxu0 0
        %605 = vmatpush1.bf16.msra.mxu0 0
        %606 = vmatprep.subr.bf16.mxu0 0
        %607 = vmatpush1.bf16.msra.mxu0 0
        %608 = vmatprep.subr.bf16.mxu0 0
        %609 = vmatpush1.bf16.msra.mxu0 %v590
        %610 = vmatprep.subr.bf16.mxu0 0
        %611 = vmatpush2.bf16.msra.mxu0 0
        %612 = vmatprep.subr.bf16.mxu0 0
        %613 = vmatpush2.bf16.msra.mxu0 0
        %614 = vmatprep.subr.bf16.mxu0 0
        %615 = vmatpush2.bf16.msra.mxu0 0
        %616 = vmatprep.subr.bf16.mxu0 0
        %617 = vmatpush2.bf16.msra.mxu0 0
        %618 = vmatprep.subr.bf16.mxu0 0
        %619 = vmatpush2.bf16.msra.mxu0 0
        %620 = vmatprep.subr.bf16.mxu0 0
        %621 = vmatpush2.bf16.msra.mxu0 0
        %622 = vmatprep.subr.bf16.mxu0 0
        %623 = vmatpush2.bf16.msra.mxu0 0
        %624 = vmatprep.subr.bf16.mxu0 0
        %625 = vmatpush2.bf16.msra.mxu0 0
        %626 = vmatprep.mubr.bf16.mxu0 0
        %627 = vmatmul.mubr.bf16.gmra.mxu0 %v592
        %v628 = vpop.f32.mrf.mxu0
        %v629 = vadd.f32 0.0, %v628
        %v630 = vpop.f32.mrf.mxu0
        %v631 = vpop.f32.mrf.mxu0
        %v632 = vadd.f32 0.0, %v631
        %v633 = vpop.f32.mrf.mxu0
        %634 = vdwg.mxu0
        %v635 = vrcp.pop %v585
        %v636 = vrcp.pop %v588
        %v637 = vmul.f32 %v629, %v635
        %v638 = vmul.f32 %v632, %v636
        %v639 = vpack.c.bf16 %v638, %v637
        %v640 = vld [vmem:[%s7] sm:$0xff]
        %v641 = vld [vmem:[%s7 + $0x8] sm:$0xff]
        %v642 = vpack.c.bf16 %v641, %v640
        %s643 = scalar_lea.vmem %s1, 64
        %v644 = vld [vmem:[%s643] sm:$0xff]
        %v645 = vld [vmem:[%s643 + $0x8] sm:$0xff]
        %v646 = vld [vmem:[%s643 + $0x10] sm:$0xff]
        %v647 = vld [vmem:[%s643 + $0x18] sm:$0xff]
        %v648 = vld [vmem:[%s643 + $0x20] sm:$0xff]
        %v649 = vld [vmem:[%s643 + $0x28] sm:$0xff]
        %v650 = vld [vmem:[%s643 + $0x30] sm:$0xff]
        %v651 = vld [vmem:[%s643 + $0x38] sm:$0xff]
        %v652 = vpack.c.bf16 %v645, %v644
        %v653 = vpack.c.bf16 %v647, %v646
        %v654 = vpack.c.bf16 %v649, %v648
        %v655 = vpack.c.bf16 %v651, %v650
        %s656 = scalar_lea.vmem %s2, 64
        %v657 = vld [vmem:[%s656] sm:$0xff]
        %v658 = vld [vmem:[%s656 + $0x8] sm:$0xff]
        %v659 = vld [vmem:[%s656 + $0x10] sm:$0xff]
        %v660 = vld [vmem:[%s656 + $0x18] sm:$0xff]
        %v661 = vld [vmem:[%s656 + $0x20] sm:$0xff]
        %v662 = vld [vmem:[%s656 + $0x28] sm:$0xff]
        %v663 = vld [vmem:[%s656 + $0x30] sm:$0xff]
        %v664 = vld [vmem:[%s656 + $0x38] sm:$0xff]
        %v665 = vpack.c.bf16 %v658, %v657
        %v666 = vpack.c.bf16 %v660, %v659
        %v667 = vpack.c.bf16 %v662, %v661
        %v668 = vpack.c.bf16 %v664, %v663
        %s669 = scalar_lea.vmem %s3, 64
        %v670 = vld [vmem:[%s669] sm:$0xff]
        %v671 = vld [vmem:[%s669 + $0x8] sm:$0xff]
        %v672 = vld [vmem:[%s669 + $0x10] sm:$0xff]
        %v673 = vld [vmem:[%s669 + $0x18] sm:$0xff]
        %v674 = vld [vmem:[%s669 + $0x20] sm:$0xff]
        %v675 = vld [vmem:[%s669 + $0x28] sm:$0xff]
        %v676 = vld [vmem:[%s669 + $0x30] sm:$0xff]
        %v677 = vld [vmem:[%s669 + $0x38] sm:$0xff]
        %v678 = vpack.c.bf16 %v671, %v670
        %v679 = vpack.c.bf16 %v673, %v672
        %v680 = vpack.c.bf16 %v675, %v674
        %v681 = vpack.c.bf16 %v677, %v676
        %s682 = scalar_lea.vmem %s4, 1
        %v683 = vld [vmem:[%s682] sm:$0x1]
        %v685 = vlaneseq
        %v686 = vshrl.u32 %v685, 7
        %v687 = vsub.s32 0, %v686
        %v688 = vrot.slane %v683, %v687
        %690 = vmatprep.subr.bf16.mxu0 0
        %691 = vmatpush1.bf16.msra.mxu0 0
        %692 = vmatprep.subr.bf16.mxu0 0
        %693 = vmatpush1.bf16.msra.mxu0 0
        %694 = vmatprep.subr.bf16.mxu0 0
        %695 = vmatpush1.bf16.msra.mxu0 0
        %696 = vmatprep.subr.bf16.mxu0 0
        %697 = vmatpush1.bf16.msra.mxu0 0
        %698 = vmatprep.subr.bf16.mxu0 0
        %699 = vmatpush1.bf16.msra.mxu0 %v655
        %700 = vmatprep.subr.bf16.mxu0 0
        %701 = vmatpush1.bf16.msra.mxu0 %v654
        %702 = vmatprep.subr.bf16.mxu0 0
        %703 = vmatpush1.bf16.msra.mxu0 %v653
        %704 = vmatprep.subr.bf16.mxu0 0
        %705 = vmatpush1.bf16.msra.mxu0 %v652
        %706 = vmatprep.subr.bf16.mxu0 0
        %707 = vmatpush2.bf16.msra.mxu0 0
        %708 = vmatprep.subr.bf16.mxu0 0
        %709 = vmatpush2.bf16.msra.mxu0 0
        %710 = vmatprep.subr.bf16.mxu0 0
        %711 = vmatpush2.bf16.msra.mxu0 0
        %712 = vmatprep.subr.bf16.mxu0 0
        %713 = vmatpush2.bf16.msra.mxu0 0
        %714 = vmatprep.subr.bf16.mxu0 0
        %715 = vmatpush2.bf16.msra.mxu0 0
        %716 = vmatprep.subr.bf16.mxu0 0
        %717 = vmatpush2.bf16.msra.mxu0 0
        %718 = vmatprep.subr.bf16.mxu0 0
        %719 = vmatpush2.bf16.msra.mxu0 0
        %720 = vmatprep.subr.bf16.mxu0 0
        %721 = vmatpush2.bf16.msra.mxu0 0
        %722 = vmatprep.mubr.bf16.mxu0 0
        %723 = vmatmul.mubr.bf16.gmra.mxu0 %v380
        %v724 = vpop.f32.mrf.mxu0
        %v725 = vadd.f32 %v688, %v724
        %v726 = vpop.f32.mrf.mxu0
        %v727 = vpop.f32.mrf.mxu0
        %v728 = vadd.f32 %v688, %v727
        %v729 = vpop.f32.mrf.mxu0
        %730 = vdwg.mxu0
        %s731 = scalar_lea.vmem %s5, 1
        %v732 = vld [vmem:[%s731] sm:$0x1]
        %v734 = vlaneseq
        %v735 = vshrl.u32 %v734, 7
        %v736 = vsub.s32 0, %v735
        %v737 = vrot.slane %v732, %v736
        %739 = vmatprep.subr.bf16.mxu0 0
        %740 = vmatpush1.bf16.msra.mxu0 0
        %741 = vmatprep.subr.bf16.mxu0 0
        %742 = vmatpush1.bf16.msra.mxu0 0
        %743 = vmatprep.subr.bf16.mxu0 0
        %744 = vmatpush1.bf16.msra.mxu0 0
        %745 = vmatprep.subr.bf16.mxu0 0
        %746 = vmatpush1.bf16.msra.mxu0 0
        %747 = vmatprep.subr.bf16.mxu0 0
        %748 = vmatpush1.bf16.msra.mxu0 %v668
        %749 = vmatprep.subr.bf16.mxu0 0
        %750 = vmatpush1.bf16.msra.mxu0 %v667
        %751 = vmatprep.subr.bf16.mxu0 0
        %752 = vmatpush1.bf16.msra.mxu0 %v666
        %753 = vmatprep.subr.bf16.mxu0 0
        %754 = vmatpush1.bf16.msra.mxu0 %v665
        %755 = vmatprep.subr.bf16.mxu0 0
        %756 = vmatpush2.bf16.msra.mxu0 0
        %757 = vmatprep.subr.bf16.mxu0 0
        %758 = vmatpush2.bf16.msra.mxu0 0
        %759 = vmatprep.subr.bf16.mxu0 0
        %760 = vmatpush2.bf16.msra.mxu0 0
        %761 = vmatprep.subr.bf16.mxu0 0
        %762 = vmatpush2.bf16.msra.mxu0 0
        %763 = vmatprep.subr.bf16.mxu0 0
        %764 = vmatpush2.bf16.msra.mxu0 0
        %765 = vmatprep.subr.bf16.mxu0 0
        %766 = vmatpush2.bf16.msra.mxu0 0
        %767 = vmatprep.subr.bf16.mxu0 0
        %768 = vmatpush2.bf16.msra.mxu0 0
        %769 = vmatprep.subr.bf16.mxu0 0
        %770 = vmatpush2.bf16.msra.mxu0 0
        %771 = vmatprep.mubr.bf16.mxu0 0
        %772 = vmatmul.mubr.bf16.gmra.mxu0 %v380
        %v773 = vpop.f32.mrf.mxu0
        %v774 = vadd.f32 %v737, %v773
        %v775 = vpop.f32.mrf.mxu0
        %v776 = vpop.f32.mrf.mxu0
        %v777 = vadd.f32 %v737, %v776
        %v778 = vpop.f32.mrf.mxu0
        %779 = vdwg.mxu0
        %s780 = scalar_lea.vmem %s6, 1
        %v781 = vld [vmem:[%s780] sm:$0x1]
        %v783 = vlaneseq
        %v784 = vshrl.u32 %v783, 7
        %v785 = vsub.s32 0, %v784
        %v786 = vrot.slane %v781, %v785
        %788 = vmatprep.subr.bf16.mxu0 0
        %789 = vmatpush1.bf16.msra.mxu0 0
        %790 = vmatprep.subr.bf16.mxu0 0
        %791 = vmatpush1.bf16.msra.mxu0 0
        %792 = vmatprep.subr.bf16.mxu0 0
        %793 = vmatpush1.bf16.msra.mxu0 0
        %794 = vmatprep.subr.bf16.mxu0 0
        %795 = vmatpush1.bf16.msra.mxu0 0
        %796 = vmatprep.subr.bf16.mxu0 0
        %797 = vmatpush1.bf16.msra.mxu0 %v681
        %798 = vmatprep.subr.bf16.mxu0 0
        %799 = vmatpush1.bf16.msra.mxu0 %v680
        %800 = vmatprep.subr.bf16.mxu0 0
        %801 = vmatpush1.bf16.msra.mxu0 %v679
        %802 = vmatprep.subr.bf16.mxu0 0
        %803 = vmatpush1.bf16.msra.mxu0 %v678
        %804 = vmatprep.subr.bf16.mxu0 0
        %805 = vmatpush2.bf16.msra.mxu0 0
        %806 = vmatprep.subr.bf16.mxu0 0
        %807 = vmatpush2.bf16.msra.mxu0 0
        %808 = vmatprep.subr.bf16.mxu0 0
        %809 = vmatpush2.bf16.msra.mxu0 0
        %810 = vmatprep.subr.bf16.mxu0 0
        %811 = vmatpush2.bf16.msra.mxu0 0
        %812 = vmatprep.subr.bf16.mxu0 0
        %813 = vmatpush2.bf16.msra.mxu0 0
        %814 = vmatprep.subr.bf16.mxu0 0
        %815 = vmatpush2.bf16.msra.mxu0 0
        %816 = vmatprep.subr.bf16.mxu0 0
        %817 = vmatpush2.bf16.msra.mxu0 0
        %818 = vmatprep.subr.bf16.mxu0 0
        %819 = vmatpush2.bf16.msra.mxu0 0
        %820 = vmatprep.mubr.bf16.mxu0 0
        %821 = vmatmul.mubr.bf16.gmra.mxu0 %v380
        %v822 = vpop.f32.mrf.mxu0
        %v823 = vadd.f32 %v786, %v822
        %v824 = vpop.f32.mrf.mxu0
        %v825 = vpop.f32.mrf.mxu0
        %v826 = vadd.f32 %v786, %v825
        %v827 = vpop.f32.mrf.mxu0
        %828 = vdwg.mxu0
        %v829 = vpack.c.bf16 %v728, %v725
        %v830 = vpack.c.bf16 %v777, %v774
        %v832 = vsel %vm521, %v829, 0
        %v835 = vsel %vm521, %v830, 0
        %837 = vmatprep.subr.bf16.mxu0 0
        %838 = vmatpush1.bf16.xpose.msra.mxu0 0
        %839 = vmatprep.subr.bf16.mxu0 0
        %840 = vmatpush1.bf16.xpose.msra.mxu0 0
        %841 = vmatprep.subr.bf16.mxu0 0
        %842 = vmatpush1.bf16.xpose.msra.mxu0 0
        %843 = vmatprep.subr.bf16.mxu0 0
        %844 = vmatpush1.bf16.xpose.msra.mxu0 0
        %845 = vmatprep.subr.bf16.mxu0 0
        %846 = vmatpush1.bf16.xpose.msra.mxu0 0
        %847 = vmatprep.subr.bf16.mxu0 0
        %848 = vmatpush1.bf16.xpose.msra.mxu0 0
        %849 = vmatprep.subr.bf16.mxu0 0
        %850 = vmatpush1.bf16.xpose.msra.mxu0 0
        %851 = vmatprep.subr.bf16.mxu0 0
        %852 = vmatpush1.bf16.xpose.msra.mxu0 %v835
        %853 = vmatprep.subr.bf16.mxu0 0
        %854 = vmatpush2.bf16.xpose.msra.mxu0 0
        %855 = vmatprep.subr.bf16.mxu0 0
        %856 = vmatpush2.bf16.xpose.msra.mxu0 0
        %857 = vmatprep.subr.bf16.mxu0 0
        %858 = vmatpush2.bf16.xpose.msra.mxu0 0
        %859 = vmatprep.subr.bf16.mxu0 0
        %860 = vmatpush2.bf16.xpose.msra.mxu0 0
        %861 = vmatprep.subr.bf16.mxu0 0
        %862 = vmatpush2.bf16.xpose.msra.mxu0 0
        %863 = vmatprep.subr.bf16.mxu0 0
        %864 = vmatpush2.bf16.xpose.msra.mxu0 0
        %865 = vmatprep.subr.bf16.mxu0 0
        %866 = vmatpush2.bf16.xpose.msra.mxu0 0
        %867 = vmatprep.subr.bf16.mxu0 0
        %868 = vmatpush2.bf16.xpose.msra.mxu0 0
        %869 = vmatprep.mubr.bf16.mxu0 0
        %870 = vmatmul.mubr.bf16.gmra.mxu0 %v832
        %v871 = vpop.f32.mrf.mxu0
        %v872 = vadd.f32 0.0, %v871
        %v873 = vpop.f32.mrf.mxu0
        %v874 = vpop.f32.mrf.mxu0
        %v875 = vadd.f32 0.0, %v874
        %v876 = vpop.f32.mrf.mxu0
        %877 = vdwg.mxu0
        %v878 = vmul.f32 %v872, 0.25
        %v879 = vmul.f32 %v875, 0.25
        %v880 = vsel %vm521, %v878, -inf
        %881 = vmax.xlane.f32.xlu0 %v880
        %v882 = vpop.xlane.xlu0 %881
        %v883 = vsel %vm521, %v879, -inf
        %884 = vmax.xlane.f32.xlu0 %v883
        %v885 = vpop.xlane.xlu0 %884
        %v886 = vsub.f32 %v878, %v882
        %v887 = vsub.f32 %v879, %v885
        %v888 = vmul.f32 %v886, 1.442695
        %v889 = vpow.pop %v888
        %v890 = vmul.f32 %v887, 1.442695
        %v891 = vpow.pop %v890
        %v892 = vsel %vm521, %v889, 0.0
        %893 = vadd.xlane.f32.xlu0 %v892
        %v894 = vpop.xlane.xlu0 %893
        %v895 = vsel %vm521, %v891, 0.0
        %896 = vadd.xlane.f32.xlu0 %v895
        %v897 = vpop.xlane.xlu0 %896
        %v898 = vpack.c.bf16 %v891, %v889
        %v899 = vpack.c.bf16 %v826, %v823
        %v901 = vsel %vm521, %v898, 0
        %903 = vmatprep.subr.bf16.mxu0 0
        %904 = vmatpush1.bf16.msra.mxu0 0
        %905 = vmatprep.subr.bf16.mxu0 0
        %906 = vmatpush1.bf16.msra.mxu0 0
        %907 = vmatprep.subr.bf16.mxu0 0
        %908 = vmatpush1.bf16.msra.mxu0 0
        %909 = vmatprep.subr.bf16.mxu0 0
        %910 = vmatpush1.bf16.msra.mxu0 0
        %911 = vmatprep.subr.bf16.mxu0 0
        %912 = vmatpush1.bf16.msra.mxu0 0
        %913 = vmatprep.subr.bf16.mxu0 0
        %914 = vmatpush1.bf16.msra.mxu0 0
        %915 = vmatprep.subr.bf16.mxu0 0
        %916 = vmatpush1.bf16.msra.mxu0 0
        %917 = vmatprep.subr.bf16.mxu0 0
        %918 = vmatpush1.bf16.msra.mxu0 %v899
        %919 = vmatprep.subr.bf16.mxu0 0
        %920 = vmatpush2.bf16.msra.mxu0 0
        %921 = vmatprep.subr.bf16.mxu0 0
        %922 = vmatpush2.bf16.msra.mxu0 0
        %923 = vmatprep.subr.bf16.mxu0 0
        %924 = vmatpush2.bf16.msra.mxu0 0
        %925 = vmatprep.subr.bf16.mxu0 0
        %926 = vmatpush2.bf16.msra.mxu0 0
        %927 = vmatprep.subr.bf16.mxu0 0
        %928 = vmatpush2.bf16.msra.mxu0 0
        %929 = vmatprep.subr.bf16.mxu0 0
        %930 = vmatpush2.bf16.msra.mxu0 0
        %931 = vmatprep.subr.bf16.mxu0 0
        %932 = vmatpush2.bf16.msra.mxu0 0
        %933 = vmatprep.subr.bf16.mxu0 0
        %934 = vmatpush2.bf16.msra.mxu0 0
        %935 = vmatprep.mubr.bf16.mxu0 0
        %936 = vmatmul.mubr.bf16.gmra.mxu0 %v901
        %v937 = vpop.f32.mrf.mxu0
        %v938 = vadd.f32 0.0, %v937
        %v939 = vpop.f32.mrf.mxu0
        %v940 = vpop.f32.mrf.mxu0
        %v941 = vadd.f32 0.0, %v940
        %v942 = vpop.f32.mrf.mxu0
        %943 = vdwg.mxu0
        %v944 = vrcp.pop %v894
        %v945 = vrcp.pop %v897
        %v946 = vmul.f32 %v938, %v944
        %v947 = vmul.f32 %v941, %v945
        %v948 = vpack.c.bf16 %v947, %v946
        %s949 = scalar_lea.vmem %s7, 16
        %v950 = vld [vmem:[%s949] sm:$0xff]
        %v951 = vld [vmem:[%s949 + $0x8] sm:$0xff]
        %v952 = vpack.c.bf16 %v951, %v950
        %v954 = vsel %vm521, %v948, 0
        %956 = vmatprep.subr.bf16.mxu0 0
        %957 = vmatpush1.bf16.msra.mxu0 0
        %958 = vmatprep.subr.bf16.mxu0 0
        %959 = vmatpush1.bf16.msra.mxu0 0
        %960 = vmatprep.subr.bf16.mxu0 0
        %961 = vmatpush1.bf16.msra.mxu0 0
        %962 = vmatprep.subr.bf16.mxu0 0
        %963 = vmatpush1.bf16.msra.mxu0 0
        %964 = vmatprep.subr.bf16.mxu0 0
        %965 = vmatpush1.bf16.msra.mxu0 0
        %966 = vmatprep.subr.bf16.mxu0 0
        %967 = vmatpush1.bf16.msra.mxu0 0
        %968 = vmatprep.subr.bf16.mxu0 0
        %969 = vmatpush1.bf16.msra.mxu0 0
        %970 = vmatprep.subr.bf16.mxu0 0
        %971 = vmatpush1.bf16.msra.mxu0 %v952
        %972 = vmatprep.subr.bf16.mxu0 0
        %973 = vmatpush2.bf16.msra.mxu0 0
        %974 = vmatprep.subr.bf16.mxu0 0
        %975 = vmatpush2.bf16.msra.mxu0 0
        %976 = vmatprep.subr.bf16.mxu0 0
        %977 = vmatpush2.bf16.msra.mxu0 0
        %978 = vmatprep.subr.bf16.mxu0 0
        %979 = vmatpush2.bf16.msra.mxu0 0
        %980 = vmatprep.subr.bf16.mxu0 0
        %981 = vmatpush2.bf16.msra.mxu0 0
        %982 = vmatprep.subr.bf16.mxu0 0
        %983 = vmatpush2.bf16.msra.mxu0 0
        %984 = vmatprep.subr.bf16.mxu0 0
        %985 = vmatpush2.bf16.msra.mxu0 0
        %986 = vmatprep.subr.bf16.mxu0 0
        %987 = vmatpush2.bf16.msra.mxu0 0
        %988 = vmatprep.mubr.bf16.mxu0 0
        %989 = vmatmul.mubr.bf16.gmra.mxu0 %v954
        %v990 = vpop.f32.mrf.mxu0
        %v991 = vadd.f32 0.0, %v990
        %v992 = vpop.f32.mrf.mxu0
        %v993 = vpop.f32.mrf.mxu0
        %v994 = vadd.f32 0.0, %v993
        %v995 = vpop.f32.mrf.mxu0
        %996 = vdwg.mxu0
        %v998 = vsel %vm521, %v639, 0
        %1000 = vmatprep.subr.bf16.mxu0 0
        %1001 = vmatpush1.bf16.msra.mxu0 0
        %1002 = vmatprep.subr.bf16.mxu0 0
        %1003 = vmatpush1.bf16.msra.mxu0 0
        %1004 = vmatprep.subr.bf16.mxu0 0
        %1005 = vmatpush1.bf16.msra.mxu0 0
        %1006 = vmatprep.subr.bf16.mxu0 0
        %1007 = vmatpush1.bf16.msra.mxu0 0
        %1008 = vmatprep.subr.bf16.mxu0 0
        %1009 = vmatpush1.bf16.msra.mxu0 0
        %1010 = vmatprep.subr.bf16.mxu0 0
        %1011 = vmatpush1.bf16.msra.mxu0 0
        %1012 = vmatprep.subr.bf16.mxu0 0
        %1013 = vmatpush1.bf16.msra.mxu0 0
        %1014 = vmatprep.subr.bf16.mxu0 0
        %1015 = vmatpush1.bf16.msra.mxu0 %v642
        %1016 = vmatprep.subr.bf16.mxu0 0
        %1017 = vmatpush2.bf16.msra.mxu0 0
        %1018 = vmatprep.subr.bf16.mxu0 0
        %1019 = vmatpush2.bf16.msra.mxu0 0
        %1020 = vmatprep.subr.bf16.mxu0 0
        %1021 = vmatpush2.bf16.msra.mxu0 0
        %1022 = vmatprep.subr.bf16.mxu0 0
        %1023 = vmatpush2.bf16.msra.mxu0 0
        %1024 = vmatprep.subr.bf16.mxu0 0
        %1025 = vmatpush2.bf16.msra.mxu0 0
        %1026 = vmatprep.subr.bf16.mxu0 0
        %1027 = vmatpush2.bf16.msra.mxu0 0
        %1028 = vmatprep.subr.bf16.mxu0 0
        %1029 = vmatpush2.bf16.msra.mxu0 0
        %1030 = vmatprep.subr.bf16.mxu0 0
        %1031 = vmatpush2.bf16.msra.mxu0 0
        %1032 = vmatprep.mubr.bf16.mxu0 0
        %1033 = vmatmul.mubr.bf16.gmra.mxu0 %v998
        %v1034 = vpop.f32.mrf.mxu0
        %v1035 = vadd.f32 %v991, %v1034
        %v1036 = vpop.f32.mrf.mxu0
        %v1037 = vpop.f32.mrf.mxu0
        %v1038 = vadd.f32 %v994, %v1037
        %v1039 = vpop.f32.mrf.mxu0
        %1040 = vdwg.mxu0
        %s1041 = scalar_lea.vmem %s1, 128
        %v1042 = vld [vmem:[%s1041] sm:$0xff]
        %v1043 = vld [vmem:[%s1041 + $0x8] sm:$0xff]
        %v1044 = vld [vmem:[%s1041 + $0x10] sm:$0xff]
        %v1045 = vld [vmem:[%s1041 + $0x18] sm:$0xff]
        %v1046 = vld [vmem:[%s1041 + $0x20] sm:$0xff]
        %v1047 = vld [vmem:[%s1041 + $0x28] sm:$0xff]
        %v1048 = vld [vmem:[%s1041 + $0x30] sm:$0xff]
        %v1049 = vld [vmem:[%s1041 + $0x38] sm:$0xff]
        %v1050 = vpack.c.bf16 %v1043, %v1042
        %v1051 = vpack.c.bf16 %v1045, %v1044
        %v1052 = vpack.c.bf16 %v1047, %v1046
        %v1053 = vpack.c.bf16 %v1049, %v1048
        %s1054 = scalar_lea.vmem %s2, 128
        %v1055 = vld [vmem:[%s1054] sm:$0xff]
        %v1056 = vld [vmem:[%s1054 + $0x8] sm:$0xff]
        %v1057 = vld [vmem:[%s1054 + $0x10] sm:$0xff]
        %v1058 = vld [vmem:[%s1054 + $0x18] sm:$0xff]
        %v1059 = vld [vmem:[%s1054 + $0x20] sm:$0xff]
        %v1060 = vld [vmem:[%s1054 + $0x28] sm:$0xff]
        %v1061 = vld [vmem:[%s1054 + $0x30] sm:$0xff]
        %v1062 = vld [vmem:[%s1054 + $0x38] sm:$0xff]
        %v1063 = vpack.c.bf16 %v1056, %v1055
        %v1064 = vpack.c.bf16 %v1058, %v1057
        %v1065 = vpack.c.bf16 %v1060, %v1059
        %v1066 = vpack.c.bf16 %v1062, %v1061
        %s1067 = scalar_lea.vmem %s3, 128
        %v1068 = vld [vmem:[%s1067] sm:$0xff]
        %v1069 = vld [vmem:[%s1067 + $0x8] sm:$0xff]
        %v1070 = vld [vmem:[%s1067 + $0x10] sm:$0xff]
        %v1071 = vld [vmem:[%s1067 + $0x18] sm:$0xff]
        %v1072 = vld [vmem:[%s1067 + $0x20] sm:$0xff]
        %v1073 = vld [vmem:[%s1067 + $0x28] sm:$0xff]
        %v1074 = vld [vmem:[%s1067 + $0x30] sm:$0xff]
        %v1075 = vld [vmem:[%s1067 + $0x38] sm:$0xff]
        %v1076 = vpack.c.bf16 %v1069, %v1068
        %v1077 = vpack.c.bf16 %v1071, %v1070
        %v1078 = vpack.c.bf16 %v1073, %v1072
        %v1079 = vpack.c.bf16 %v1075, %v1074
        %s1080 = scalar_lea.vmem %s4, 2
        %v1081 = vld [vmem:[%s1080] sm:$0x1]
        %v1083 = vlaneseq
        %v1084 = vshrl.u32 %v1083, 7
        %v1085 = vsub.s32 0, %v1084
        %v1086 = vrot.slane %v1081, %v1085
        %1088 = vmatprep.subr.bf16.mxu0 0
        %1089 = vmatpush1.bf16.msra.mxu0 0
        %1090 = vmatprep.subr.bf16.mxu0 0
        %1091 = vmatpush1.bf16.msra.mxu0 0
        %1092 = vmatprep.subr.bf16.mxu0 0
        %1093 = vmatpush1.bf16.msra.mxu0 0
        %1094 = vmatprep.subr.bf16.mxu0 0
        %1095 = vmatpush1.bf16.msra.mxu0 0
        %1096 = vmatprep.subr.bf16.mxu0 0
        %1097 = vmatpush1.bf16.msra.mxu0 %v1053
        %1098 = vmatprep.subr.bf16.mxu0 0
        %1099 = vmatpush1.bf16.msra.mxu0 %v1052
        %1100 = vmatprep.subr.bf16.mxu0 0
        %1101 = vmatpush1.bf16.msra.mxu0 %v1051
        %1102 = vmatprep.subr.bf16.mxu0 0
        %1103 = vmatpush1.bf16.msra.mxu0 %v1050
        %1104 = vmatprep.subr.bf16.mxu0 0
        %1105 = vmatpush2.bf16.msra.mxu0 0
        %1106 = vmatprep.subr.bf16.mxu0 0
        %1107 = vmatpush2.bf16.msra.mxu0 0
        %1108 = vmatprep.subr.bf16.mxu0 0
        %1109 = vmatpush2.bf16.msra.mxu0 0
        %1110 = vmatprep.subr.bf16.mxu0 0
        %1111 = vmatpush2.bf16.msra.mxu0 0
        %1112 = vmatprep.subr.bf16.mxu0 0
        %1113 = vmatpush2.bf16.msra.mxu0 0
        %1114 = vmatprep.subr.bf16.mxu0 0
        %1115 = vmatpush2.bf16.msra.mxu0 0
        %1116 = vmatprep.subr.bf16.mxu0 0
        %1117 = vmatpush2.bf16.msra.mxu0 0
        %1118 = vmatprep.subr.bf16.mxu0 0
        %1119 = vmatpush2.bf16.msra.mxu0 0
        %1120 = vmatprep.mubr.bf16.mxu0 0
        %1121 = vmatmul.mubr.bf16.gmra.mxu0 %v380
        %v1122 = vpop.f32.mrf.mxu0
        %v1123 = vadd.f32 %v1086, %v1122
        %v1124 = vpop.f32.mrf.mxu0
        %v1125 = vpop.f32.mrf.mxu0
        %v1126 = vadd.f32 %v1086, %v1125
        %v1127 = vpop.f32.mrf.mxu0
        %1128 = vdwg.mxu0
        %s1129 = scalar_lea.vmem %s5, 2
        %v1130 = vld [vmem:[%s1129] sm:$0x1]
        %v1132 = vlaneseq
        %v1133 = vshrl.u32 %v1132, 7
        %v1134 = vsub.s32 0, %v1133
        %v1135 = vrot.slane %v1130, %v1134
        %1137 = vmatprep.subr.bf16.mxu0 0
        %1138 = vmatpush1.bf16.msra.mxu0 0
        %1139 = vmatprep.subr.bf16.mxu0 0
        %1140 = vmatpush1.bf16.msra.mxu0 0
        %1141 = vmatprep.subr.bf16.mxu0 0
        %1142 = vmatpush1.bf16.msra.mxu0 0
        %1143 = vmatprep.subr.bf16.mxu0 0
        %1144 = vmatpush1.bf16.msra.mxu0 0
        %1145 = vmatprep.subr.bf16.mxu0 0
        %1146 = vmatpush1.bf16.msra.mxu0 %v1066
        %1147 = vmatprep.subr.bf16.mxu0 0
        %1148 = vmatpush1.bf16.msra.mxu0 %v1065
        %1149 = vmatprep.subr.bf16.mxu0 0
        %1150 = vmatpush1.bf16.msra.mxu0 %v1064
        %1151 = vmatprep.subr.bf16.mxu0 0
        %1152 = vmatpush1.bf16.msra.mxu0 %v1063
        %1153 = vmatprep.subr.bf16.mxu0 0
        %1154 = vmatpush2.bf16.msra.mxu0 0
        %1155 = vmatprep.subr.bf16.mxu0 0
        %1156 = vmatpush2.bf16.msra.mxu0 0
        %1157 = vmatprep.subr.bf16.mxu0 0
        %1158 = vmatpush2.bf16.msra.mxu0 0
        %1159 = vmatprep.subr.bf16.mxu0 0
        %1160 = vmatpush2.bf16.msra.mxu0 0
        %1161 = vmatprep.subr.bf16.mxu0 0
        %1162 = vmatpush2.bf16.msra.mxu0 0
        %1163 = vmatprep.subr.bf16.mxu0 0
        %1164 = vmatpush2.bf16.msra.mxu0 0
        %1165 = vmatprep.subr.bf16.mxu0 0
        %1166 = vmatpush2.bf16.msra.mxu0 0
        %1167 = vmatprep.subr.bf16.mxu0 0
        %1168 = vmatpush2.bf16.msra.mxu0 0
        %1169 = vmatprep.mubr.bf16.mxu0 0
        %1170 = vmatmul.mubr.bf16.gmra.mxu0 %v380
        %v1171 = vpop.f32.mrf.mxu0
        %v1172 = vadd.f32 %v1135, %v1171
        %v1173 = vpop.f32.mrf.mxu0
        %v1174 = vpop.f32.mrf.mxu0
        %v1175 = vadd.f32 %v1135, %v1174
        %v1176 = vpop.f32.mrf.mxu0
        %1177 = vdwg.mxu0
        %s1178 = scalar_lea.vmem %s6, 2
        %v1179 = vld [vmem:[%s1178] sm:$0x1]
        %v1181 = vlaneseq
        %v1182 = vshrl.u32 %v1181, 7
        %v1183 = vsub.s32 0, %v1182
        %v1184 = vrot.slane %v1179, %v1183
        %1186 = vmatprep.subr.bf16.mxu0 0
        %1187 = vmatpush1.bf16.msra.mxu0 0
        %1188 = vmatprep.subr.bf16.mxu0 0
        %1189 = vmatpush1.bf16.msra.mxu0 0
        %1190 = vmatprep.subr.bf16.mxu0 0
        %1191 = vmatpush1.bf16.msra.mxu0 0
        %1192 = vmatprep.subr.bf16.mxu0 0
        %1193 = vmatpush1.bf16.msra.mxu0 0
        %1194 = vmatprep.subr.bf16.mxu0 0
        %1195 = vmatpush1.bf16.msra.mxu0 %v1079
        %1196 = vmatprep.subr.bf16.mxu0 0
        %1197 = vmatpush1.bf16.msra.mxu0 %v1078
        %1198 = vmatprep.subr.bf16.mxu0 0
        %1199 = vmatpush1.bf16.msra.mxu0 %v1077
        %1200 = vmatprep.subr.bf16.mxu0 0
        %1201 = vmatpush1.bf16.msra.mxu0 %v1076
        %1202 = vmatprep.subr.bf16.mxu0 0
        %1203 = vmatpush2.bf16.msra.mxu0 0
        %1204 = vmatprep.subr.bf16.mxu0 0
        %1205 = vmatpush2.bf16.msra.mxu0 0
        %1206 = vmatprep.subr.bf16.mxu0 0
        %1207 = vmatpush2.bf16.msra.mxu0 0
        %1208 = vmatprep.subr.bf16.mxu0 0
        %1209 = vmatpush2.bf16.msra.mxu0 0
        %1210 = vmatprep.subr.bf16.mxu0 0
        %1211 = vmatpush2.bf16.msra.mxu0 0
        %1212 = vmatprep.subr.bf16.mxu0 0
        %1213 = vmatpush2.bf16.msra.mxu0 0
        %1214 = vmatprep.subr.bf16.mxu0 0
        %1215 = vmatpush2.bf16.msra.mxu0 0
        %1216 = vmatprep.subr.bf16.mxu0 0
        %1217 = vmatpush2.bf16.msra.mxu0 0
        %1218 = vmatprep.mubr.bf16.mxu0 0
        %1219 = vmatmul.mubr.bf16.gmra.mxu0 %v380
        %v1220 = vpop.f32.mrf.mxu0
        %v1221 = vadd.f32 %v1184, %v1220
        %v1222 = vpop.f32.mrf.mxu0
        %v1223 = vpop.f32.mrf.mxu0
        %v1224 = vadd.f32 %v1184, %v1223
        %v1225 = vpop.f32.mrf.mxu0
        %1226 = vdwg.mxu0
        %v1227 = vpack.c.bf16 %v1126, %v1123
        %v1228 = vpack.c.bf16 %v1175, %v1172
        %v1230 = vsel %vm521, %v1227, 0
        %v1233 = vsel %vm521, %v1228, 0
        %1235 = vmatprep.subr.bf16.mxu0 0
        %1236 = vmatpush1.bf16.xpose.msra.mxu0 0
        %1237 = vmatprep.subr.bf16.mxu0 0
        %1238 = vmatpush1.bf16.xpose.msra.mxu0 0
        %1239 = vmatprep.subr.bf16.mxu0 0
        %1240 = vmatpush1.bf16.xpose.msra.mxu0 0
        %1241 = vmatprep.subr.bf16.mxu0 0
        %1242 = vmatpush1.bf16.xpose.msra.mxu0 0
        %1243 = vmatprep.subr.bf16.mxu0 0
        %1244 = vmatpush1.bf16.xpose.msra.mxu0 0
        %1245 = vmatprep.subr.bf16.mxu0 0
        %1246 = vmatpush1.bf16.xpose.msra.mxu0 0
        %1247 = vmatprep.subr.bf16.mxu0 0
        %1248 = vmatpush1.bf16.xpose.msra.mxu0 0
        %1249 = vmatprep.subr.bf16.mxu0 0
        %1250 = vmatpush1.bf16.xpose.msra.mxu0 %v1233
        %1251 = vmatprep.subr.bf16.mxu0 0
        %1252 = vmatpush2.bf16.xpose.msra.mxu0 0
        %1253 = vmatprep.subr.bf16.mxu0 0
        %1254 = vmatpush2.bf16.xpose.msra.mxu0 0
        %1255 = vmatprep.subr.bf16.mxu0 0
        %1256 = vmatpush2.bf16.xpose.msra.mxu0 0
        %1257 = vmatprep.subr.bf16.mxu0 0
        %1258 = vmatpush2.bf16.xpose.msra.mxu0 0
        %1259 = vmatprep.subr.bf16.mxu0 0
        %1260 = vmatpush2.bf16.xpose.msra.mxu0 0
        %1261 = vmatprep.subr.bf16.mxu0 0
        %1262 = vmatpush2.bf16.xpose.msra.mxu0 0
        %1263 = vmatprep.subr.bf16.mxu0 0
        %1264 = vmatpush2.bf16.xpose.msra.mxu0 0
        %1265 = vmatprep.subr.bf16.mxu0 0
        %1266 = vmatpush2.bf16.xpose.msra.mxu0 0
        %1267 = vmatprep.mubr.bf16.mxu0 0
        %1268 = vmatmul.mubr.bf16.gmra.mxu0 %v1230
        %v1269 = vpop.f32.mrf.mxu0
        %v1270 = vadd.f32 0.0, %v1269
        %v1271 = vpop.f32.mrf.mxu0
        %v1272 = vpop.f32.mrf.mxu0
        %v1273 = vadd.f32 0.0, %v1272
        %v1274 = vpop.f32.mrf.mxu0
        %1275 = vdwg.mxu0
        %v1276 = vmul.f32 %v1270, 0.25
        %v1277 = vmul.f32 %v1273, 0.25
        %v1278 = vsel %vm521, %v1276, -inf
        %1279 = vmax.xlane.f32.xlu0 %v1278
        %v1280 = vpop.xlane.xlu0 %1279
        %v1281 = vsel %vm521, %v1277, -inf
        %1282 = vmax.xlane.f32.xlu0 %v1281
        %v1283 = vpop.xlane.xlu0 %1282
        %v1284 = vsub.f32 %v1276, %v1280
        %v1285 = vsub.f32 %v1277, %v1283
        %v1286 = vmul.f32 %v1284, 1.442695
        %v1287 = vpow.pop %v1286
        %v1288 = vmul.f32 %v1285, 1.442695
        %v1289 = vpow.pop %v1288
        %v1290 = vsel %vm521, %v1287, 0.0
        %1291 = vadd.xlane.f32.xlu0 %v1290
        %v1292 = vpop.xlane.xlu0 %1291
        %v1293 = vsel %vm521, %v1289, 0.0
        %1294 = vadd.xlane.f32.xlu0 %v1293
        %v1295 = vpop.xlane.xlu0 %1294
        %v1296 = vpack.c.bf16 %v1289, %v1287
        %v1297 = vpack.c.bf16 %v1224, %v1221
        %v1299 = vsel %vm521, %v1296, 0
        %1301 = vmatprep.subr.bf16.mxu0 0
        %1302 = vmatpush1.bf16.msra.mxu0 0
        %1303 = vmatprep.subr.bf16.mxu0 0
        %1304 = vmatpush1.bf16.msra.mxu0 0
        %1305 = vmatprep.subr.bf16.mxu0 0
        %1306 = vmatpush1.bf16.msra.mxu0 0
        %1307 = vmatprep.subr.bf16.mxu0 0
        %1308 = vmatpush1.bf16.msra.mxu0 0
        %1309 = vmatprep.subr.bf16.mxu0 0
        %1310 = vmatpush1.bf16.msra.mxu0 0
        %1311 = vmatprep.subr.bf16.mxu0 0
        %1312 = vmatpush1.bf16.msra.mxu0 0
        %1313 = vmatprep.subr.bf16.mxu0 0
        %1314 = vmatpush1.bf16.msra.mxu0 0
        %1315 = vmatprep.subr.bf16.mxu0 0
        %1316 = vmatpush1.bf16.msra.mxu0 %v1297
        %1317 = vmatprep.subr.bf16.mxu0 0
        %1318 = vmatpush2.bf16.msra.mxu0 0
        %1319 = vmatprep.subr.bf16.mxu0 0
        %1320 = vmatpush2.bf16.msra.mxu0 0
        %1321 = vmatprep.subr.bf16.mxu0 0
        %1322 = vmatpush2.bf16.msra.mxu0 0
        %1323 = vmatprep.subr.bf16.mxu0 0
        %1324 = vmatpush2.bf16.msra.mxu0 0
        %1325 = vmatprep.subr.bf16.mxu0 0
        %1326 = vmatpush2.bf16.msra.mxu0 0
        %1327 = vmatprep.subr.bf16.mxu0 0
        %1328 = vmatpush2.bf16.msra.mxu0 0
        %1329 = vmatprep.subr.bf16.mxu0 0
        %1330 = vmatpush2.bf16.msra.mxu0 0
        %1331 = vmatprep.subr.bf16.mxu0 0
        %1332 = vmatpush2.bf16.msra.mxu0 0
        %1333 = vmatprep.mubr.bf16.mxu0 0
        %1334 = vmatmul.mubr.bf16.gmra.mxu0 %v1299
        %v1335 = vpop.f32.mrf.mxu0
        %v1336 = vadd.f32 0.0, %v1335
        %v1337 = vpop.f32.mrf.mxu0
        %v1338 = vpop.f32.mrf.mxu0
        %v1339 = vadd.f32 0.0, %v1338
        %v1340 = vpop.f32.mrf.mxu0
        %1341 = vdwg.mxu0
        %v1342 = vrcp.pop %v1292
        %v1343 = vrcp.pop %v1295
        %v1344 = vmul.f32 %v1336, %v1342
        %v1345 = vmul.f32 %v1339, %v1343
        %v1346 = vpack.c.bf16 %v1345, %v1344
        %s1347 = scalar_lea.vmem %s7, 32
        %v1348 = vld [vmem:[%s1347] sm:$0xff]
        %v1349 = vld [vmem:[%s1347 + $0x8] sm:$0xff]
        %v1350 = vpack.c.bf16 %v1349, %v1348
        %v1352 = vsel %vm521, %v1346, 0
        %1354 = vmatprep.subr.bf16.mxu0 0
        %1355 = vmatpush1.bf16.msra.mxu0 0
        %1356 = vmatprep.subr.bf16.mxu0 0
        %1357 = vmatpush1.bf16.msra.mxu0 0
        %1358 = vmatprep.subr.bf16.mxu0 0
        %1359 = vmatpush1.bf16.msra.mxu0 0
        %1360 = vmatprep.subr.bf16.mxu0 0
        %1361 = vmatpush1.bf16.msra.mxu0 0
        %1362 = vmatprep.subr.bf16.mxu0 0
        %1363 = vmatpush1.bf16.msra.mxu0 0
        %1364 = vmatprep.subr.bf16.mxu0 0
        %1365 = vmatpush1.bf16.msra.mxu0 0
        %1366 = vmatprep.subr.bf16.mxu0 0
        %1367 = vmatpush1.bf16.msra.mxu0 0
        %1368 = vmatprep.subr.bf16.mxu0 0
        %1369 = vmatpush1.bf16.msra.mxu0 %v1350
        %1370 = vmatprep.subr.bf16.mxu0 0
        %1371 = vmatpush2.bf16.msra.mxu0 0
        %1372 = vmatprep.subr.bf16.mxu0 0
        %1373 = vmatpush2.bf16.msra.mxu0 0
        %1374 = vmatprep.subr.bf16.mxu0 0
        %1375 = vmatpush2.bf16.msra.mxu0 0
        %1376 = vmatprep.subr.bf16.mxu0 0
        %1377 = vmatpush2.bf16.msra.mxu0 0
        %1378 = vmatprep.subr.bf16.mxu0 0
        %1379 = vmatpush2.bf16.msra.mxu0 0
        %1380 = vmatprep.subr.bf16.mxu0 0
        %1381 = vmatpush2.bf16.msra.mxu0 0
        %1382 = vmatprep.subr.bf16.mxu0 0
        %1383 = vmatpush2.bf16.msra.mxu0 0
        %1384 = vmatprep.subr.bf16.mxu0 0
        %1385 = vmatpush2.bf16.msra.mxu0 0
        %1386 = vmatprep.mubr.bf16.mxu0 0
        %1387 = vmatmul.mubr.bf16.gmra.mxu0 %v1352
        %v1388 = vpop.f32.mrf.mxu0
        %v1389 = vadd.f32 0.0, %v1388
        %v1390 = vpop.f32.mrf.mxu0
        %v1391 = vpop.f32.mrf.mxu0
        %v1392 = vadd.f32 0.0, %v1391
        %v1393 = vpop.f32.mrf.mxu0
        %1394 = vdwg.mxu0
        %v1395 = vadd.f32 %v1035, %v1389
        %v1396 = vadd.f32 %v1038, %v1392
        %s1397 = scalar_lea.vmem %s1, 192
        %v1398 = vld [vmem:[%s1397] sm:$0xff]
        %v1399 = vld [vmem:[%s1397 + $0x8] sm:$0xff]
        %v1400 = vld [vmem:[%s1397 + $0x10] sm:$0xff]
        %v1401 = vld [vmem:[%s1397 + $0x18] sm:$0xff]
        %v1402 = vld [vmem:[%s1397 + $0x20] sm:$0xff]
        %v1403 = vld [vmem:[%s1397 + $0x28] sm:$0xff]
        %v1404 = vld [vmem:[%s1397 + $0x30] sm:$0xff]
        %v1405 = vld [vmem:[%s1397 + $0x38] sm:$0xff]
        %v1406 = vpack.c.bf16 %v1399, %v1398
        %v1407 = vpack.c.bf16 %v1401, %v1400
        %v1408 = vpack.c.bf16 %v1403, %v1402
        %v1409 = vpack.c.bf16 %v1405, %v1404
        %s1410 = scalar_lea.vmem %s2, 192
        %v1411 = vld [vmem:[%s1410] sm:$0xff]
        %v1412 = vld [vmem:[%s1410 + $0x8] sm:$0xff]
        %v1413 = vld [vmem:[%s1410 + $0x10] sm:$0xff]
        %v1414 = vld [vmem:[%s1410 + $0x18] sm:$0xff]
        %v1415 = vld [vmem:[%s1410 + $0x20] sm:$0xff]
        %v1416 = vld [vmem:[%s1410 + $0x28] sm:$0xff]
        %v1417 = vld [vmem:[%s1410 + $0x30] sm:$0xff]
        %v1418 = vld [vmem:[%s1410 + $0x38] sm:$0xff]
        %v1419 = vpack.c.bf16 %v1412, %v1411
        %v1420 = vpack.c.bf16 %v1414, %v1413
        %v1421 = vpack.c.bf16 %v1416, %v1415
        %v1422 = vpack.c.bf16 %v1418, %v1417
        %s1423 = scalar_lea.vmem %s3, 192
        %v1424 = vld [vmem:[%s1423] sm:$0xff]
        %v1425 = vld [vmem:[%s1423 + $0x8] sm:$0xff]
        %v1426 = vld [vmem:[%s1423 + $0x10] sm:$0xff]
        %v1427 = vld [vmem:[%s1423 + $0x18] sm:$0xff]
        %v1428 = vld [vmem:[%s1423 + $0x20] sm:$0xff]
        %v1429 = vld [vmem:[%s1423 + $0x28] sm:$0xff]
        %v1430 = vld [vmem:[%s1423 + $0x30] sm:$0xff]
        %v1431 = vld [vmem:[%s1423 + $0x38] sm:$0xff]
        %v1432 = vpack.c.bf16 %v1425, %v1424
        %v1433 = vpack.c.bf16 %v1427, %v1426
        %v1434 = vpack.c.bf16 %v1429, %v1428
        %v1435 = vpack.c.bf16 %v1431, %v1430
        %s1436 = scalar_lea.vmem %s4, 3
        %v1437 = vld [vmem:[%s1436] sm:$0x1]
        %v1439 = vlaneseq
        %v1440 = vshrl.u32 %v1439, 7
        %v1441 = vsub.s32 0, %v1440
        %v1442 = vrot.slane %v1437, %v1441
        %1444 = vmatprep.subr.bf16.mxu0 0
        %1445 = vmatpush1.bf16.msra.mxu0 0
        %1446 = vmatprep.subr.bf16.mxu0 0
        %1447 = vmatpush1.bf16.msra.mxu0 0
        %1448 = vmatprep.subr.bf16.mxu0 0
        %1449 = vmatpush1.bf16.msra.mxu0 0
        %1450 = vmatprep.subr.bf16.mxu0 0
        %1451 = vmatpush1.bf16.msra.mxu0 0
        %1452 = vmatprep.subr.bf16.mxu0 0
        %1453 = vmatpush1.bf16.msra.mxu0 %v1409
        %1454 = vmatprep.subr.bf16.mxu0 0
        %1455 = vmatpush1.bf16.msra.mxu0 %v1408
        %1456 = vmatprep.subr.bf16.mxu0 0
        %1457 = vmatpush1.bf16.msra.mxu0 %v1407
        %1458 = vmatprep.subr.bf16.mxu0 0
        %1459 = vmatpush1.bf16.msra.mxu0 %v1406
        %1460 = vmatprep.subr.bf16.mxu0 0
        %1461 = vmatpush2.bf16.msra.mxu0 0
        %1462 = vmatprep.subr.bf16.mxu0 0
        %1463 = vmatpush2.bf16.msra.mxu0 0
        %1464 = vmatprep.subr.bf16.mxu0 0
        %1465 = vmatpush2.bf16.msra.mxu0 0
        %1466 = vmatprep.subr.bf16.mxu0 0
        %1467 = vmatpush2.bf16.msra.mxu0 0
        %1468 = vmatprep.subr.bf16.mxu0 0
        %1469 = vmatpush2.bf16.msra.mxu0 0
        %1470 = vmatprep.subr.bf16.mxu0 0
        %1471 = vmatpush2.bf16.msra.mxu0 0
        %1472 = vmatprep.subr.bf16.mxu0 0
        %1473 = vmatpush2.bf16.msra.mxu0 0
        %1474 = vmatprep.subr.bf16.mxu0 0
        %1475 = vmatpush2.bf16.msra.mxu0 0
        %1476 = vmatprep.mubr.bf16.mxu0 0
        %1477 = vmatmul.mubr.bf16.gmra.mxu0 %v380
        %v1478 = vpop.f32.mrf.mxu0
        %v1479 = vadd.f32 %v1442, %v1478
        %v1480 = vpop.f32.mrf.mxu0
        %v1481 = vpop.f32.mrf.mxu0
        %v1482 = vadd.f32 %v1442, %v1481
        %v1483 = vpop.f32.mrf.mxu0
        %1484 = vdwg.mxu0
        %s1485 = scalar_lea.vmem %s5, 3
        %v1486 = vld [vmem:[%s1485] sm:$0x1]
        %v1488 = vlaneseq
        %v1489 = vshrl.u32 %v1488, 7
        %v1490 = vsub.s32 0, %v1489
        %v1491 = vrot.slane %v1486, %v1490
        %1493 = vmatprep.subr.bf16.mxu0 0
        %1494 = vmatpush1.bf16.msra.mxu0 0
        %1495 = vmatprep.subr.bf16.mxu0 0
        %1496 = vmatpush1.bf16.msra.mxu0 0
        %1497 = vmatprep.subr.bf16.mxu0 0
        %1498 = vmatpush1.bf16.msra.mxu0 0
        %1499 = vmatprep.subr.bf16.mxu0 0
        %1500 = vmatpush1.bf16.msra.mxu0 0
        %1501 = vmatprep.subr.bf16.mxu0 0
        %1502 = vmatpush1.bf16.msra.mxu0 %v1422
        %1503 = vmatprep.subr.bf16.mxu0 0
        %1504 = vmatpush1.bf16.msra.mxu0 %v1421
        %1505 = vmatprep.subr.bf16.mxu0 0
        %1506 = vmatpush1.bf16.msra.mxu0 %v1420
        %1507 = vmatprep.subr.bf16.mxu0 0
        %1508 = vmatpush1.bf16.msra.mxu0 %v1419
        %1509 = vmatprep.subr.bf16.mxu0 0
        %1510 = vmatpush2.bf16.msra.mxu0 0
        %1511 = vmatprep.subr.bf16.mxu0 0
        %1512 = vmatpush2.bf16.msra.mxu0 0
        %1513 = vmatprep.subr.bf16.mxu0 0
        %1514 = vmatpush2.bf16.msra.mxu0 0
        %1515 = vmatprep.subr.bf16.mxu0 0
        %1516 = vmatpush2.bf16.msra.mxu0 0
        %1517 = vmatprep.subr.bf16.mxu0 0
        %1518 = vmatpush2.bf16.msra.mxu0 0
        %1519 = vmatprep.subr.bf16.mxu0 0
        %1520 = vmatpush2.bf16.msra.mxu0 0
        %1521 = vmatprep.subr.bf16.mxu0 0
        %1522 = vmatpush2.bf16.msra.mxu0 0
        %1523 = vmatprep.subr.bf16.mxu0 0
        %1524 = vmatpush2.bf16.msra.mxu0 0
        %1525 = vmatprep.mubr.bf16.mxu0 0
        %1526 = vmatmul.mubr.bf16.gmra.mxu0 %v380
        %v1527 = vpop.f32.mrf.mxu0
        %v1528 = vadd.f32 %v1491, %v1527
        %v1529 = vpop.f32.mrf.mxu0
        %v1530 = vpop.f32.mrf.mxu0
        %v1531 = vadd.f32 %v1491, %v1530
        %v1532 = vpop.f32.mrf.mxu0
        %1533 = vdwg.mxu0
        %s1534 = scalar_lea.vmem %s6, 3
        %v1535 = vld [vmem:[%s1534] sm:$0x1]
        %v1537 = vlaneseq
        %v1538 = vshrl.u32 %v1537, 7
        %v1539 = vsub.s32 0, %v1538
        %v1540 = vrot.slane %v1535, %v1539
        %1542 = vmatprep.subr.bf16.mxu0 0
        %1543 = vmatpush1.bf16.msra.mxu0 0
        %1544 = vmatprep.subr.bf16.mxu0 0
        %1545 = vmatpush1.bf16.msra.mxu0 0
        %1546 = vmatprep.subr.bf16.mxu0 0
        %1547 = vmatpush1.bf16.msra.mxu0 0
        %1548 = vmatprep.subr.bf16.mxu0 0
        %1549 = vmatpush1.bf16.msra.mxu0 0
        %1550 = vmatprep.subr.bf16.mxu0 0
        %1551 = vmatpush1.bf16.msra.mxu0 %v1435
        %1552 = vmatprep.subr.bf16.mxu0 0
        %1553 = vmatpush1.bf16.msra.mxu0 %v1434
        %1554 = vmatprep.subr.bf16.mxu0 0
        %1555 = vmatpush1.bf16.msra.mxu0 %v1433
        %1556 = vmatprep.subr.bf16.mxu0 0
        %1557 = vmatpush1.bf16.msra.mxu0 %v1432
        %1558 = vmatprep.subr.bf16.mxu0 0
        %1559 = vmatpush2.bf16.msra.mxu0 0
        %1560 = vmatprep.subr.bf16.mxu0 0
        %1561 = vmatpush2.bf16.msra.mxu0 0
        %1562 = vmatprep.subr.bf16.mxu0 0
        %1563 = vmatpush2.bf16.msra.mxu0 0
        %1564 = vmatprep.subr.bf16.mxu0 0
        %1565 = vmatpush2.bf16.msra.mxu0 0
        %1566 = vmatprep.subr.bf16.mxu0 0
        %1567 = vmatpush2.bf16.msra.mxu0 0
        %1568 = vmatprep.subr.bf16.mxu0 0
        %1569 = vmatpush2.bf16.msra.mxu0 0
        %1570 = vmatprep.subr.bf16.mxu0 0
        %1571 = vmatpush2.bf16.msra.mxu0 0
        %1572 = vmatprep.subr.bf16.mxu0 0
        %1573 = vmatpush2.bf16.msra.mxu0 0
        %1574 = vmatprep.mubr.bf16.mxu0 0
        %1575 = vmatmul.mubr.bf16.gmra.mxu0 %v380
        %v1576 = vpop.f32.mrf.mxu0
        %v1577 = vadd.f32 %v1540, %v1576
        %v1578 = vpop.f32.mrf.mxu0
        %v1579 = vpop.f32.mrf.mxu0
        %v1580 = vadd.f32 %v1540, %v1579
        %v1581 = vpop.f32.mrf.mxu0
        %1582 = vdwg.mxu0
        %v1583 = vpack.c.bf16 %v1482, %v1479
        %v1584 = vpack.c.bf16 %v1531, %v1528
        %v1586 = vsel %vm521, %v1583, 0
        %v1589 = vsel %vm521, %v1584, 0
        %1591 = vmatprep.subr.bf16.mxu0 0
        %1592 = vmatpush1.bf16.xpose.msra.mxu0 0
        %1593 = vmatprep.subr.bf16.mxu0 0
        %1594 = vmatpush1.bf16.xpose.msra.mxu0 0
        %1595 = vmatprep.subr.bf16.mxu0 0
        %1596 = vmatpush1.bf16.xpose.msra.mxu0 0
        %1597 = vmatprep.subr.bf16.mxu0 0
        %1598 = vmatpush1.bf16.xpose.msra.mxu0 0
        %1599 = vmatprep.subr.bf16.mxu0 0
        %1600 = vmatpush1.bf16.xpose.msra.mxu0 0
        %1601 = vmatprep.subr.bf16.mxu0 0
        %1602 = vmatpush1.bf16.xpose.msra.mxu0 0
        %1603 = vmatprep.subr.bf16.mxu0 0
        %1604 = vmatpush1.bf16.xpose.msra.mxu0 0
        %1605 = vmatprep.subr.bf16.mxu0 0
        %1606 = vmatpush1.bf16.xpose.msra.mxu0 %v1589
        %1607 = vmatprep.subr.bf16.mxu0 0
        %1608 = vmatpush2.bf16.xpose.msra.mxu0 0
        %1609 = vmatprep.subr.bf16.mxu0 0
        %1610 = vmatpush2.bf16.xpose.msra.mxu0 0
        %1611 = vmatprep.subr.bf16.mxu0 0
        %1612 = vmatpush2.bf16.xpose.msra.mxu0 0
        %1613 = vmatprep.subr.bf16.mxu0 0
        %1614 = vmatpush2.bf16.xpose.msra.mxu0 0
        %1615 = vmatprep.subr.bf16.mxu0 0
        %1616 = vmatpush2.bf16.xpose.msra.mxu0 0
        %1617 = vmatprep.subr.bf16.mxu0 0
        %1618 = vmatpush2.bf16.xpose.msra.mxu0 0
        %1619 = vmatprep.subr.bf16.mxu0 0
        %1620 = vmatpush2.bf16.xpose.msra.mxu0 0
        %1621 = vmatprep.subr.bf16.mxu0 0
        %1622 = vmatpush2.bf16.xpose.msra.mxu0 0
        %1623 = vmatprep.mubr.bf16.mxu0 0
        %1624 = vmatmul.mubr.bf16.gmra.mxu0 %v1586
        %v1625 = vpop.f32.mrf.mxu0
        %v1626 = vadd.f32 0.0, %v1625
        %v1627 = vpop.f32.mrf.mxu0
        %v1628 = vpop.f32.mrf.mxu0
        %v1629 = vadd.f32 0.0, %v1628
        %v1630 = vpop.f32.mrf.mxu0
        %1631 = vdwg.mxu0
        %v1632 = vmul.f32 %v1626, 0.25
        %v1633 = vmul.f32 %v1629, 0.25
        %v1634 = vsel %vm521, %v1632, -inf
        %1635 = vmax.xlane.f32.xlu0 %v1634
        %v1636 = vpop.xlane.xlu0 %1635
        %v1637 = vsel %vm521, %v1633, -inf
        %1638 = vmax.xlane.f32.xlu0 %v1637
        %v1639 = vpop.xlane.xlu0 %1638
        %v1640 = vsub.f32 %v1632, %v1636
        %v1641 = vsub.f32 %v1633, %v1639
        %v1642 = vmul.f32 %v1640, 1.442695
        %v1643 = vpow.pop %v1642
        %v1644 = vmul.f32 %v1641, 1.442695
        %v1645 = vpow.pop %v1644
        %v1646 = vsel %vm521, %v1643, 0.0
        %1647 = vadd.xlane.f32.xlu0 %v1646
        %v1648 = vpop.xlane.xlu0 %1647
        %v1649 = vsel %vm521, %v1645, 0.0
        %1650 = vadd.xlane.f32.xlu0 %v1649
        %v1651 = vpop.xlane.xlu0 %1650
        %v1652 = vpack.c.bf16 %v1645, %v1643
        %v1653 = vpack.c.bf16 %v1580, %v1577
        %v1655 = vsel %vm521, %v1652, 0
        %1657 = vmatprep.subr.bf16.mxu0 0
        %1658 = vmatpush1.bf16.msra.mxu0 0
        %1659 = vmatprep.subr.bf16.mxu0 0
        %1660 = vmatpush1.bf16.msra.mxu0 0
        %1661 = vmatprep.subr.bf16.mxu0 0
        %1662 = vmatpush1.bf16.msra.mxu0 0
        %1663 = vmatprep.subr.bf16.mxu0 0
        %1664 = vmatpush1.bf16.msra.mxu0 0
        %1665 = vmatprep.subr.bf16.mxu0 0
        %1666 = vmatpush1.bf16.msra.mxu0 0
        %1667 = vmatprep.subr.bf16.mxu0 0
        %1668 = vmatpush1.bf16.msra.mxu0 0
        %1669 = vmatprep.subr.bf16.mxu0 0
        %1670 = vmatpush1.bf16.msra.mxu0 0
        %1671 = vmatprep.subr.bf16.mxu0 0
        %1672 = vmatpush1.bf16.msra.mxu0 %v1653
        %1673 = vmatprep.subr.bf16.mxu0 0
        %1674 = vmatpush2.bf16.msra.mxu0 0
        %1675 = vmatprep.subr.bf16.mxu0 0
        %1676 = vmatpush2.bf16.msra.mxu0 0
        %1677 = vmatprep.subr.bf16.mxu0 0
        %1678 = vmatpush2.bf16.msra.mxu0 0
        %1679 = vmatprep.subr.bf16.mxu0 0
        %1680 = vmatpush2.bf16.msra.mxu0 0
        %1681 = vmatprep.subr.bf16.mxu0 0
        %1682 = vmatpush2.bf16.msra.mxu0 0
        %1683 = vmatprep.subr.bf16.mxu0 0
        %1684 = vmatpush2.bf16.msra.mxu0 0
        %1685 = vmatprep.subr.bf16.mxu0 0
        %1686 = vmatpush2.bf16.msra.mxu0 0
        %1687 = vmatprep.subr.bf16.mxu0 0
        %1688 = vmatpush2.bf16.msra.mxu0 0
        %1689 = vmatprep.mubr.bf16.mxu0 0
        %1690 = vmatmul.mubr.bf16.gmra.mxu0 %v1655
        %v1691 = vpop.f32.mrf.mxu0
        %v1692 = vadd.f32 0.0, %v1691
        %v1693 = vpop.f32.mrf.mxu0
        %v1694 = vpop.f32.mrf.mxu0
        %v1695 = vadd.f32 0.0, %v1694
        %v1696 = vpop.f32.mrf.mxu0
        %1697 = vdwg.mxu0
        %v1698 = vrcp.pop %v1648
        %v1699 = vrcp.pop %v1651
        %v1700 = vmul.f32 %v1692, %v1698
        %v1701 = vmul.f32 %v1695, %v1699
        %v1702 = vpack.c.bf16 %v1701, %v1700
        %s1703 = scalar_lea.vmem %s7, 48
        %v1704 = vld [vmem:[%s1703] sm:$0xff]
        %v1705 = vld [vmem:[%s1703 + $0x8] sm:$0xff]
        %v1706 = vpack.c.bf16 %v1705, %v1704
        %v1708 = vsel %vm521, %v1702, 0
        %1710 = vmatprep.subr.bf16.mxu0 0
        %1711 = vmatpush1.bf16.msra.mxu0 0
        %1712 = vmatprep.subr.bf16.mxu0 0
        %1713 = vmatpush1.bf16.msra.mxu0 0
        %1714 = vmatprep.subr.bf16.mxu0 0
        %1715 = vmatpush1.bf16.msra.mxu0 0
        %1716 = vmatprep.subr.bf16.mxu0 0
        %1717 = vmatpush1.bf16.msra.mxu0 0
        %1718 = vmatprep.subr.bf16.mxu0 0
        %1719 = vmatpush1.bf16.msra.mxu0 0
        %1720 = vmatprep.subr.bf16.mxu0 0
        %1721 = vmatpush1.bf16.msra.mxu0 0
        %1722 = vmatprep.subr.bf16.mxu0 0
        %1723 = vmatpush1.bf16.msra.mxu0 0
        %1724 = vmatprep.subr.bf16.mxu0 0
        %1725 = vmatpush1.bf16.msra.mxu0 %v1706
        %1726 = vmatprep.subr.bf16.mxu0 0
        %1727 = vmatpush2.bf16.msra.mxu0 0
        %1728 = vmatprep.subr.bf16.mxu0 0
        %1729 = vmatpush2.bf16.msra.mxu0 0
        %1730 = vmatprep.subr.bf16.mxu0 0
        %1731 = vmatpush2.bf16.msra.mxu0 0
        %1732 = vmatprep.subr.bf16.mxu0 0
        %1733 = vmatpush2.bf16.msra.mxu0 0
        %1734 = vmatprep.subr.bf16.mxu0 0
        %1735 = vmatpush2.bf16.msra.mxu0 0
        %1736 = vmatprep.subr.bf16.mxu0 0
        %1737 = vmatpush2.bf16.msra.mxu0 0
        %1738 = vmatprep.subr.bf16.mxu0 0
        %1739 = vmatpush2.bf16.msra.mxu0 0
        %1740 = vmatprep.subr.bf16.mxu0 0
        %1741 = vmatpush2.bf16.msra.mxu0 0
        %1742 = vmatprep.mubr.bf16.mxu0 0
        %1743 = vmatmul.mubr.bf16.gmra.mxu0 %v1708
        %v1744 = vpop.f32.mrf.mxu0
        %v1745 = vadd.f32 0.0, %v1744
        %v1746 = vpop.f32.mrf.mxu0
        %v1747 = vpop.f32.mrf.mxu0
        %v1748 = vadd.f32 0.0, %v1747
        %v1749 = vpop.f32.mrf.mxu0
        %1750 = vdwg.mxu0
        %v1751 = vadd.f32 %v1395, %v1745
        %v1752 = vadd.f32 %v1396, %v1748
        %v1753 = vld [vmem:[%s8] sm:$0x1]
        %v1755 = vlaneseq
        %v1756 = vshrl.u32 %v1755, 7
        %v1757 = vsub.s32 0, %v1756
        %v1758 = vrot.slane %v1753, %v1757
        %v1760 = vadd.f32 %v1751, %v1758
        %v1761 = vadd.f32 %v1752, %v1758
        %1762 = vst.msk [vmem:[%s325] sm:$0xff] %vm378, %v1760
        %1763 = vst.msk [vmem:[%s325 + $0x8] sm:$0xff] %vm378, %v1761
        %s1764 = sand.u32 %s225, 1
        %s1765 = scalar_lea.sflag [#allocation3], %s1764
        %s1766 = sand.u32 %s225, 1
        %s1767 = smul.addr %s1766, 16
        %s1768 = scalar_lea.vmem [#allocation2], %s1767
        // Predicated region
        $region57: #{tpu_custom_call.1} parent=55 // pred_check
          %p1769 = pneg %p235
        $region58: #{tpu_custom_call.1} parent=55 // pred_check_branch
          %1771 = sbr.rel (%p1769) target = $region60
        $region59: #{tpu_custom_call.1} parent=55 // pred_region
          %s1773 = ssub.s32 256, 256
          %1774 = vsyncadd %s1765, %s1773
          %s1775 = smul.addr %s23, 2
          %s1776 = smul.addr %s1775, 128
          %s1777 = scalar_lea.hbm %s9, %s1776
          %s1778 = sshll.u32 %s1768, 4
          %s1779 = int_to_ptr.vmem [resolvable:$true] %s1778
          %1784 = dma.vmem_to_hbm [thread:$0]  %s1779, 256, %s1777, %s1765, 128, 128, 8
        $region60: #{tpu_custom_call.1} parent=55 // pred_fallthru
          _
      $region56: #{tpu_custom_call.1} parent=5 // pred_fallthru
        _
      %p1785 = scmp.le.s32.totalorder 2, %s18
      // Predicated region
      $region61: #{tpu_custom_call.1} parent=5 // pred_check
        %p1786 = pneg %p1785
      $region62: #{tpu_custom_call.1} parent=5 // pred_check_branch
        %1788 = sbr.rel (%p1786) target = $region64
      $region63: #{tpu_custom_call.1} parent=5 // pred_region
        %s1789 = ssub.s32 %s18, 2
        // Predicated region
        $region65: #{tpu_custom_call.1} parent=63 // pred_check
          %p1790 = pneg %p241
        $region66: #{tpu_custom_call.1} parent=63 // pred_check_branch
          %1792 = sbr.rel (%p1790) target = $region68
        $region67: #{tpu_custom_call.1} parent=63 // pred_region
          %s1793 = sand.u32 %s226, 1
          %s1794 = scalar_lea.sflag [#allocation3], %s1793
          %s1795 = sand.u32 %s226, 1
          %s1796 = smul.addr %s1795, 16
          %s1797 = scalar_lea.vmem [#allocation2], %s1796
          %1798 = dma.done %s1794, 256
        $region68: #{tpu_custom_call.1} parent=63 // pred_fallthru
          _
      $region64: #{tpu_custom_call.1} parent=5 // pred_fallthru
        _
    $region6: #{tpu_custom_call.1} parent=1 // loop_footer
      %s22 = sadd.s32 1, %s18
    $region7: #{tpu_custom_call.1} parent=1 // loop_footer_branch
      %17 = sbr.rel target = $region3
    $region8: #{tpu_custom_call.1} parent=1 // loop_exit
      _
    %1799 = vsyncpa [#allocation3], 1
    %s1800 = scalar_lea.sflag [#allocation3], 1
    %1801 = vsyncpa %s1800, 1

</llo_original>
